<compile_context>
chip_gen: v7x
topology: tpu7x:2x2x1
jax: 0.10.0
libtpu: 0.0.40
codegen_flags: <defaults>
</compile_context>

<pallas_src>
import jax
import jax.numpy as jnp
import numpy as np
from jax.experimental import pallas as pl
from jax.experimental.pallas import tpu as pltpu


# ----------------------------------------------------------------------------
# Fully fused Pallas kernel: bilinear upsample + pad + concat + DoubleConv
# ----------------------------------------------------------------------------
def up_fused_kernel(x1_ref, x2_ref, mh_ref, g1_ref, g2_ref, sh_ref,
                    a1_ref, b1_ref, a2_ref, b2_ref, o_ref):
    """Per batch element (lane-packed layout, everything is a 2D matmul):
      x1_ref : (1, h, w*c1)        deep feature
      x2_ref : (1, H, W*c2)        skip feature
      mh_ref : (H, h)              row interp (align_corners=True, diffY pad = zero rows)
      g1_ref : (w*c1, W*Cin)       col interp * channel placement of x1 (diffX pad = zero cols)
      g2_ref : (W*c2, W*Cin)       channel placement of x2
      sh_ref : (3, H, H)           dy row-shift operators (zero-fill rows = H halo)
      a1_ref : (3, W*Cin, W*Cmid)  conv1 banded weights (dx taps + W folded into K, BN scale folded)
      b1_ref : (1, W*Cmid)         conv1 folded bias
      a2_ref : (3, W*Cmid, W*Cout) conv2 banded weights
      b2_ref : (1, W*Cout)         conv2 folded bias
      o_ref  : (1, H, W*Cout)
    """
    f32 = jnp.float32

    def dot(a, b):
        return jnp.dot(a, b, preferred_element_type=f32)

    # Bilinear upsample of x1 (two MXU matmuls); F.pad and the [x2, x1]
    # channel concat are folded into mh / g1 / g2 (zero rows/cols = padding).
    t = dot(mh_ref[...], x1_ref[0])                              # (H, w*c1)
    x = dot(t, g1_ref[...]) + dot(x2_ref[0], g2_ref[...])        # (H, W*Cin)

    sh_dn = sh_ref[0]        # row y <- y-1 (zero fill)  == dy = 0 tap window
    sh_up = sh_ref[2]        # row y <- y+1 (zero fill)  == dy = 2 tap window

    # conv1 (3x3, pad=1) + folded BN + ReLU : 3 banded matmuls, K = W*Cin.
    acc = dot(dot(sh_dn, x), a1_ref[0])
    acc = acc + dot(x, a1_ref[1])
    acc = acc + dot(dot(sh_up, x), a1_ref[2])
    y1 = jnp.maximum(acc + b1_ref[...], 0.0)                     # (H, W*Cmid)

    # conv2 (3x3, pad=1) + folded BN + ReLU
    acc2 = dot(dot(sh_dn, y1), a2_ref[0])
    acc2 = acc2 + dot(y1, a2_ref[1])
    acc2 = acc2 + dot(dot(sh_up, y1), a2_ref[2])
    o_ref[0] = jnp.maximum(acc2 + b2_ref[...], 0.0).astype(o_ref.dtype)


# ----------------------------------------------------------------------------
# Wrapper-side parameter packing (one-time per checkpoint in a real model)
# ----------------------------------------------------------------------------
def interp_matrix(n_out, n_in):
    """Row-interpolation matrix matching torch Upsample(align_corners=True)."""
    if n_in == 1:
        return jnp.ones((n_out, 1), jnp.float32)
    src = jnp.arange(n_out, dtype=jnp.float32) * (n_in - 1) / (n_out - 1)
    lo = jnp.clip(jnp.floor(src).astype(jnp.int32), 0, n_in - 2)
    frac = src - lo.astype(jnp.float32)
    cols = jnp.arange(n_in)
    M = ((cols[None, :] == lo[:, None]) * (1.0 - frac)[:, None]
         + (cols[None, :] == (lo + 1)[:, None]) * frac[:, None])
    return M.astype(jnp.float32)


def banded_conv_weights(w_hwio, W):
    """Per-dy banded matrices A[dy] with
         A[dy][xin*Cin + ci, xout*Cout + co] = w[dy, dx, ci, co]  where xin = xout + dx - 1,
       boundary taps clipped (== zero padding along W)."""
    kh, kw, Cin, Cout = w_hwio.shape
    mats = []
    for dy in range(kh):
        A = jnp.zeros((W * Cin, W * Cout), jnp.float32)
        for dx in range(kw):
            A = A + jnp.kron(jnp.eye(W, k=1 - dx, dtype=jnp.float32),
                             w_hwio[dy, dx].astype(jnp.float32))
        mats.append(A)
    return jnp.stack(mats)                           # (3, W*Cin, W*Cout)


def placement_matrices(Mw_pad, c1, c2, W):
    """G2 scatters x2 channels into slots [0:c2] of the lane-packed conv input;
       G1 width-interpolates x1 and scatters it into slots [c2:c2+c1]."""
    f32 = jnp.float32
    E1 = jnp.concatenate([jnp.zeros((c1, c2), f32), jnp.eye(c1, dtype=f32)], axis=1)
    E2 = jnp.concatenate([jnp.eye(c2, dtype=f32), jnp.zeros((c2, c1), f32)], axis=1)
    G1 = jnp.kron(Mw_pad.T.astype(f32), E1)          # (w*c1, W*(c1+c2))
    G2 = jnp.kron(jnp.eye(W, dtype=f32), E2)         # (W*c2, W*(c1+c2))
    return G1, G2


def fold_bn(conv_bias, gamma, beta, mean, var, eps=1e-5):
    scale = gamma / jnp.sqrt(var + eps)
    bias = beta + scale * (conv_bias - mean)
    return scale, bias


# ----------------------------------------------------------------------------
# Public forward (NCHW in / NCHW out, like the PyTorch module)
# ----------------------------------------------------------------------------
def up_forward(x1_nchw, x2_nchw, params):
    x1 = jnp.transpose(x1_nchw, (0, 2, 3, 1)).astype(jnp.float32)   # (N, h, w, c1)
    x2 = jnp.transpose(x2_nchw, (0, 2, 3, 1)).astype(jnp.float32)   # (N, H, W, c2)
    N, h, w, c1 = x1.shape
    _, H, W, c2 = x2.shape
    Cin = c1 + c2
    w1, s1, b1 = params['w1'], params['s1'], params['b1']
    w2, s2, b2 = params['w2'], params['s2'], params['b2']
    Cmid, Cout = w1.shape[-1], w2.shape[-1]

    # nn.Upsample(scale=2, bilinear, align_corners=True) + F.pad, expressed as
    # interpolation matrices whose pad rows/cols are zero.
    diffY, diffX = H - 2 * h, W - 2 * w
    Mh = jnp.pad(interp_matrix(2 * h, h), ((diffY // 2, diffY - diffY // 2), (0, 0)))
    Mw = jnp.pad(interp_matrix(2 * w, w), ((diffX // 2, diffX - diffX // 2), (0, 0)))
    G1, G2 = placement_matrices(Mw, c1, c2, W)
    Sh = jnp.stack([jnp.eye(H, k=-1, dtype=jnp.float32),
                    jnp.eye(H, dtype=jnp.float32),
                    jnp.eye(H, k=1, dtype=jnp.float32)])            # dy shift operators
    A1 = banded_conv_weights(w1 * s1, W)          # BN scale folded into conv weights
    A2 = banded_conv_weights(w2 * s2, W)
    b1t = jnp.tile(b1.astype(jnp.float32), W)[None, :]              # (1, W*Cmid)
    b2t = jnp.tile(b2.astype(jnp.float32), W)[None, :]              # (1, W*Cout)

    # Lane-packed activations: channels ride with W on the 128-lane axis.
    x1p = x1.reshape(N, h, w * c1)
    x2p = x2.reshape(N, H, W * c2)

    y2d = pl.pallas_call(
        up_fused_kernel,
        out_shape=jax.ShapeDtypeStruct((N, H, W * Cout), jnp.float32),
        grid=(N,),
        in_specs=[
            pl.BlockSpec((1, h, w * c1), lambda n: (n, 0, 0)),
            pl.BlockSpec((1, H, W * c2), lambda n: (n, 0, 0)),
            pl.BlockSpec((H, h), lambda n: (0, 0)),
            pl.BlockSpec((w * c1, W * Cin), lambda n: (0, 0)),
            pl.BlockSpec((W * c2, W * Cin), lambda n: (0, 0)),
            pl.BlockSpec((3, H, H), lambda n: (0, 0, 0)),
            pl.BlockSpec((3, W * Cin, W * Cmid), lambda n: (0, 0, 0)),
            pl.BlockSpec((1, W * Cmid), lambda n: (0, 0)),
            pl.BlockSpec((3, W * Cmid, W * Cout), lambda n: (0, 0, 0)),
            pl.BlockSpec((1, W * Cout), lambda n: (0, 0)),
        ],
        out_specs=pl.BlockSpec((1, H, W * Cout), lambda n: (n, 0, 0)),
        compiler_params=pltpu.CompilerParams(
            dimension_semantics=("parallel",)),
    )(x1p, x2p, Mh, G1, G2, Sh, A1, b1t, A2, b2t)

    # (H, W*Cout) is exactly the NHWC memory layout -> free reshape.
    y = y2d.reshape(N, H, W, Cout)
    return jnp.transpose(y, (0, 3, 1, 2))         # back to NCHW


# ----------------------------------------------------------------------------
# Pure-JAX reference (lax.conv) for verification
# ----------------------------------------------------------------------------
def ref_conv_bn_relu(x_nhwc, w_hwio, scale, bias):
    y = jax.lax.conv_general_dilated(
        x_nhwc, w_hwio.astype(jnp.float32), window_strides=(1, 1), padding='SAME',
        dimension_numbers=('NHWC', 'HWIO', 'NHWC'),
        precision=jax.lax.Precision.HIGHEST)
    return jnp.maximum(y * scale + bias, 0.0)


def up_forward_ref(x1_nchw, x2_nchw, params):
    x1 = jnp.transpose(x1_nchw, (0, 2, 3, 1)).astype(jnp.float32)
    x2 = jnp.transpose(x2_nchw, (0, 2, 3, 1)).astype(jnp.float32)
    h, w = x1.shape[1], x1.shape[2]
    x1 = jnp.einsum('hp,wq,npqc->nhwc',
                    interp_matrix(2 * h, h), interp_matrix(2 * w, w), x1,
                    precision=jax.lax.Precision.HIGHEST)
    diffY = x2.shape[1] - x1.shape[1]
    diffX = x2.shape[2] - x1.shape[2]
    x1 = jnp.pad(x1, ((0, 0), (diffY // 2, diffY - diffY // 2),
                      (diffX // 2, diffX - diffX // 2), (0, 0)))
    x = jnp.concatenate([x2, x1], axis=-1)
    y = ref_conv_bn_relu(x, params['w1'], params['s1'], params['b1'])
    y = ref_conv_bn_relu(y, params['w2'], params['s2'], params['b2'])
    return jnp.transpose(y, (0, 3, 1, 2))


# ----------------------------------------------------------------------------
if __name__ == "__main__":
    # Module config: Up(in_channels=8, out_channels=4, bilinear=True)
    #   -> DoubleConv(8, 4, mid_channels=4)
    in_ch, out_ch = 8, 4
    mid_ch = in_ch // 2
    N, h, w = 2, 8, 8          # x1 spatial (deep feature)
    H2, W2 = 16, 16            # x2 spatial (skip connection)
    c1 = c2 = in_ch // 2       # x1/x2 channels; c1 + c2 == in_ch

    key = jax.random.PRNGKey(0)
    ks = jax.random.split(key, 16)

    x1 = jax.random.normal(ks[0], (N, c1, h, w), jnp.float32)
    x2 = jax.random.normal(ks[1], (N, c2, H2, W2), jnp.float32)

    # Deterministic parameter init (conv OIHW like PyTorch, then -> HWIO).
    w1_oihw = 0.1 * jax.random.normal(ks[2], (mid_ch, in_ch, 3, 3), jnp.float32)
    cb1 = 0.1 * jax.random.normal(ks[3], (mid_ch,), jnp.float32)
    g1 = 1.0 + 0.1 * jax.random.normal(ks[4], (mid_ch,), jnp.float32)
    be1 = 0.1 * jax.random.normal(ks[5], (mid_ch,), jnp.float32)
    m1 = 0.1 * jax.random.normal(ks[6], (mid_ch,), jnp.float32)
    v1 = 1.0 + 0.1 * jnp.abs(jax.random.normal(ks[7], (mid_ch,), jnp.float32))

    w2_oihw = 0.1 * jax.random.normal(ks[8], (out_ch, mid_ch, 3, 3), jnp.float32)
    cb2 = 0.1 * jax.random.normal(ks[9], (out_ch,), jnp.float32)
    g2 = 1.0 + 0.1 * jax.random.normal(ks[10], (out_ch,), jnp.float32)
    be2 = 0.1 * jax.random.normal(ks[11], (out_ch,), jnp.float32)
    m2 = 0.1 * jax.random.normal(ks[12], (out_ch,), jnp.float32)
    v2 = 1.0 + 0.1 * jnp.abs(jax.random.normal(ks[13], (out_ch,), jnp.float32))

    s1, b1 = fold_bn(cb1, g1, be1, m1, v1)
    s2, b2 = fold_bn(cb2, g2, be2, m2, v2)
    params = {
        'w1': jnp.transpose(w1_oihw, (2, 3, 1, 0)),  # HWIO
        's1': s1, 'b1': b1,
        'w2': jnp.transpose(w2_oihw, (2, 3, 1, 0)),
        's2': s2, 'b2': b2,
    }

    up_jit = jax.jit(up_forward)
    out = jax.block_until_ready(up_jit(x1, x2, params))
    ref = jax.block_until_ready(up_forward_ref(x1, x2, params))

    assert out.shape == (N, out_ch, H2, W2), out.shape
    np.testing.assert_allclose(np.asarray(out), np.asarray(ref),
                               rtol=1e-3, atol=1e-3)
    print("KERNEL_OK")
</pallas_src>

<mosaic_0001>
module attributes {stable_mosaic.version = 11 : i64} {
  func.func @up_fused_kernel(%arg0: i32, %arg1: memref<1x8x32xf32, #tpu.memory_space<vmem>>, %arg2: memref<1x16x64xf32, #tpu.memory_space<vmem>>, %arg3: memref<16x8xf32, #tpu.memory_space<vmem>>, %arg4: memref<32x128xf32, #tpu.memory_space<vmem>>, %arg5: memref<64x128xf32, #tpu.memory_space<vmem>>, %arg6: memref<3x16x16xf32, #tpu.memory_space<vmem>>, %arg7: memref<3x128x64xf32, #tpu.memory_space<vmem>>, %arg8: memref<1x64xf32, #tpu.memory_space<vmem>>, %arg9: memref<3x64x64xf32, #tpu.memory_space<vmem>>, %arg10: memref<1x64xf32, #tpu.memory_space<vmem>>, %arg11: memref<1x16x64xf32, #tpu.memory_space<vmem>>) attributes {dimension_semantics = [#tpu.dimension_semantics<parallel>], iteration_bounds = array<i64: 2>, scalar_prefetch = 0 : i64, scratch_operands = 0 : i64, tpu.core_type = #tpu.core_type<tc>, window_params = [{transform_indices = @transform_0, window_bounds = array<i64: 1, 8, 32>}, {transform_indices = @transform_1, window_bounds = array<i64: 1, 16, 64>}, {pipeline_mode = #tpu.pipeline_mode<synchronous>, transform_indices = @transform_2, window_bounds = array<i64: 16, 8>}, {pipeline_mode = #tpu.pipeline_mode<synchronous>, transform_indices = @transform_3, window_bounds = array<i64: 32, 128>}, {pipeline_mode = #tpu.pipeline_mode<synchronous>, transform_indices = @transform_4, window_bounds = array<i64: 64, 128>}, {pipeline_mode = #tpu.pipeline_mode<synchronous>, transform_indices = @transform_5, window_bounds = array<i64: 3, 16, 16>}, {pipeline_mode = #tpu.pipeline_mode<synchronous>, transform_indices = @transform_6, window_bounds = array<i64: 3, 128, 64>}, {pipeline_mode = #tpu.pipeline_mode<synchronous>, transform_indices = @transform_7, window_bounds = array<i64: 1, 64>}, {pipeline_mode = #tpu.pipeline_mode<synchronous>, transform_indices = @transform_8, window_bounds = array<i64: 3, 64, 64>}, {pipeline_mode = #tpu.pipeline_mode<synchronous>, transform_indices = @transform_9, window_bounds = array<i64: 1, 64>}, {transform_indices = @transform_10, window_bounds = array<i64: 1, 16, 64>}]} {
    %c0 = arith.constant 0 : index
    %c0_0 = arith.constant 0 : index
    %0 = vector.load %arg3[%c0, %c0_0] : memref<16x8xf32, #tpu.memory_space<vmem>>, vector<16x8xf32>
    %c0_1 = arith.constant 0 : index
    %c0_2 = arith.constant 0 : index
    %c0_3 = arith.constant 0 : index
    %1 = vector.load %arg1[%c0_1, %c0_2, %c0_3] : memref<1x8x32xf32, #tpu.memory_space<vmem>>, vector<1x8x32xf32>
    %2 = vector.shape_cast %1 : vector<1x8x32xf32> to vector<8x32xf32>
    %cst = arith.constant dense<0.000000e+00> : vector<16x32xf32>
    %3 = tpu.matmul %0, %2, %cst {dimension_numbers = #tpu.dot_dimension_numbers<[1], [0], [0], [1], [0, 0, 1, 1], [], []>} : vector<16x8xf32>, vector<8x32xf32>, vector<16x32xf32> -> vector<16x32xf32>
    %c0_4 = arith.constant 0 : index
    %c0_5 = arith.constant 0 : index
    %4 = vector.load %arg4[%c0_4, %c0_5] : memref<32x128xf32, #tpu.memory_space<vmem>>, vector<32x128xf32>
    %cst_6 = arith.constant dense<0.000000e+00> : vector<16x128xf32>
    %5 = tpu.matmul %3, %4, %cst_6 {dimension_numbers = #tpu.dot_dimension_numbers<[1], [0], [0], [1], [0, 0, 1, 1], [], []>} : vector<16x32xf32>, vector<32x128xf32>, vector<16x128xf32> -> vector<16x128xf32>
    %c0_7 = arith.constant 0 : index
    %c0_8 = arith.constant 0 : index
    %c0_9 = arith.constant 0 : index
    %6 = vector.load %arg2[%c0_7, %c0_8, %c0_9] : memref<1x16x64xf32, #tpu.memory_space<vmem>>, vector<1x16x64xf32>
    %7 = vector.shape_cast %6 : vector<1x16x64xf32> to vector<16x64xf32>
    %c0_10 = arith.constant 0 : index
    %c0_11 = arith.constant 0 : index
    %8 = vector.load %arg5[%c0_10, %c0_11] : memref<64x128xf32, #tpu.memory_space<vmem>>, vector<64x128xf32>
    %cst_12 = arith.constant dense<0.000000e+00> : vector<16x128xf32>
    %9 = tpu.matmul %7, %8, %cst_12 {dimension_numbers = #tpu.dot_dimension_numbers<[1], [0], [0], [1], [0, 0, 1, 1], [], []>} : vector<16x64xf32>, vector<64x128xf32>, vector<16x128xf32> -> vector<16x128xf32>
    %10 = arith.addf %5, %9 : vector<16x128xf32>
    %c0_13 = arith.constant 0 : index
    %c0_14 = arith.constant 0 : index
    %c0_15 = arith.constant 0 : index
    %11 = vector.load %arg6[%c0_13, %c0_14, %c0_15] : memref<3x16x16xf32, #tpu.memory_space<vmem>>, vector<1x16x16xf32>
    %12 = vector.shape_cast %11 : vector<1x16x16xf32> to vector<16x16xf32>
    %c2 = arith.constant 2 : index
    %c0_16 = arith.constant 0 : index
    %c0_17 = arith.constant 0 : index
    %13 = vector.load %arg6[%c2, %c0_16, %c0_17] : memref<3x16x16xf32, #tpu.memory_space<vmem>>, vector<1x16x16xf32>
    %14 = vector.shape_cast %13 : vector<1x16x16xf32> to vector<16x16xf32>
    %cst_18 = arith.constant dense<0.000000e+00> : vector<16x128xf32>
    %15 = tpu.matmul %12, %10, %cst_18 {dimension_numbers = #tpu.dot_dimension_numbers<[1], [0], [0], [1], [0, 0, 1, 1], [], []>} : vector<16x16xf32>, vector<16x128xf32>, vector<16x128xf32> -> vector<16x128xf32>
    %c0_19 = arith.constant 0 : index
    %c0_20 = arith.constant 0 : index
    %c0_21 = arith.constant 0 : index
    %16 = vector.load %arg7[%c0_19, %c0_20, %c0_21] : memref<3x128x64xf32, #tpu.memory_space<vmem>>, vector<1x128x64xf32>
    %17 = vector.shape_cast %16 : vector<1x128x64xf32> to vector<128x64xf32>
    %cst_22 = arith.constant dense<0.000000e+00> : vector<16x64xf32>
    %18 = tpu.matmul %15, %17, %cst_22 {dimension_numbers = #tpu.dot_dimension_numbers<[1], [0], [0], [1], [0, 0, 1, 1], [], []>} : vector<16x128xf32>, vector<128x64xf32>, vector<16x64xf32> -> vector<16x64xf32>
    %c1 = arith.constant 1 : index
    %c0_23 = arith.constant 0 : index
    %c0_24 = arith.constant 0 : index
    %19 = vector.load %arg7[%c1, %c0_23, %c0_24] : memref<3x128x64xf32, #tpu.memory_space<vmem>>, vector<1x128x64xf32>
    %20 = vector.shape_cast %19 : vector<1x128x64xf32> to vector<128x64xf32>
    %cst_25 = arith.constant dense<0.000000e+00> : vector<16x64xf32>
    %21 = tpu.matmul %10, %20, %cst_25 {dimension_numbers = #tpu.dot_dimension_numbers<[1], [0], [0], [1], [0, 0, 1, 1], [], []>} : vector<16x128xf32>, vector<128x64xf32>, vector<16x64xf32> -> vector<16x64xf32>
    %22 = arith.addf %18, %21 : vector<16x64xf32>
    %cst_26 = arith.constant dense<0.000000e+00> : vector<16x128xf32>
    %23 = tpu.matmul %14, %10, %cst_26 {dimension_numbers = #tpu.dot_dimension_numbers<[1], [0], [0], [1], [0, 0, 1, 1], [], []>} : vector<16x16xf32>, vector<16x128xf32>, vector<16x128xf32> -> vector<16x128xf32>
    %c2_27 = arith.constant 2 : index
    %c0_28 = arith.constant 0 : index
    %c0_29 = arith.constant 0 : index
    %24 = vector.load %arg7[%c2_27, %c0_28, %c0_29] : memref<3x128x64xf32, #tpu.memory_space<vmem>>, vector<1x128x64xf32>
    %25 = vector.shape_cast %24 : vector<1x128x64xf32> to vector<128x64xf32>
    %cst_30 = arith.constant dense<0.000000e+00> : vector<16x64xf32>
    %26 = tpu.matmul %23, %25, %cst_30 {dimension_numbers = #tpu.dot_dimension_numbers<[1], [0], [0], [1], [0, 0, 1, 1], [], []>} : vector<16x128xf32>, vector<128x64xf32>, vector<16x64xf32> -> vector<16x64xf32>
    %27 = arith.addf %22, %26 : vector<16x64xf32>
    %c0_31 = arith.constant 0 : index
    %c0_32 = arith.constant 0 : index
    %28 = vector.load %arg8[%c0_31, %c0_32] : memref<1x64xf32, #tpu.memory_space<vmem>>, vector<1x64xf32>
    %29 = vector.broadcast %28 : vector<1x64xf32> to vector<16x64xf32>
    %30 = arith.addf %27, %29 : vector<16x64xf32>
    %cst_33 = arith.constant 0.000000e+00 : f32
    %31 = vector.broadcast %cst_33 : f32 to vector<16x64xf32>
    %32 = arith.maximumf %30, %31 : vector<16x64xf32>
    %cst_34 = arith.constant dense<0.000000e+00> : vector<16x64xf32>
    %33 = tpu.matmul %12, %32, %cst_34 {dimension_numbers = #tpu.dot_dimension_numbers<[1], [0], [0], [1], [0, 0, 1, 1], [], []>} : vector<16x16xf32>, vector<16x64xf32>, vector<16x64xf32> -> vector<16x64xf32>
    %c0_35 = arith.constant 0 : index
    %c0_36 = arith.constant 0 : index
    %c0_37 = arith.constant 0 : index
    %34 = vector.load %arg9[%c0_35, %c0_36, %c0_37] : memref<3x64x64xf32, #tpu.memory_space<vmem>>, vector<1x64x64xf32>
    %35 = vector.shape_cast %34 : vector<1x64x64xf32> to vector<64x64xf32>
    %cst_38 = arith.constant dense<0.000000e+00> : vector<16x64xf32>
    %36 = tpu.matmul %33, %35, %cst_38 {dimension_numbers = #tpu.dot_dimension_numbers<[1], [0], [0], [1], [0, 0, 1, 1], [], []>} : vector<16x64xf32>, vector<64x64xf32>, vector<16x64xf32> -> vector<16x64xf32>
    %c1_39 = arith.constant 1 : index
    %c0_40 = arith.constant 0 : index
    %c0_41 = arith.constant 0 : index
    %37 = vector.load %arg9[%c1_39, %c0_40, %c0_41] : memref<3x64x64xf32, #tpu.memory_space<vmem>>, vector<1x64x64xf32>
    %38 = vector.shape_cast %37 : vector<1x64x64xf32> to vector<64x64xf32>
    %cst_42 = arith.constant dense<0.000000e+00> : vector<16x64xf32>
    %39 = tpu.matmul %32, %38, %cst_42 {dimension_numbers = #tpu.dot_dimension_numbers<[1], [0], [0], [1], [0, 0, 1, 1], [], []>} : vector<16x64xf32>, vector<64x64xf32>, vector<16x64xf32> -> vector<16x64xf32>
    %40 = arith.addf %36, %39 : vector<16x64xf32>
    %cst_43 = arith.constant dense<0.000000e+00> : vector<16x64xf32>
    %41 = tpu.matmul %14, %32, %cst_43 {dimension_numbers = #tpu.dot_dimension_numbers<[1], [0], [0], [1], [0, 0, 1, 1], [], []>} : vector<16x16xf32>, vector<16x64xf32>, vector<16x64xf32> -> vector<16x64xf32>
    %c2_44 = arith.constant 2 : index
    %c0_45 = arith.constant 0 : index
    %c0_46 = arith.constant 0 : index
    %42 = vector.load %arg9[%c2_44, %c0_45, %c0_46] : memref<3x64x64xf32, #tpu.memory_space<vmem>>, vector<1x64x64xf32>
    %43 = vector.shape_cast %42 : vector<1x64x64xf32> to vector<64x64xf32>
    %cst_47 = arith.constant dense<0.000000e+00> : vector<16x64xf32>
    %44 = tpu.matmul %41, %43, %cst_47 {dimension_numbers = #tpu.dot_dimension_numbers<[1], [0], [0], [1], [0, 0, 1, 1], [], []>} : vector<16x64xf32>, vector<64x64xf32>, vector<16x64xf32> -> vector<16x64xf32>
    %45 = arith.addf %40, %44 : vector<16x64xf32>
    %c0_48 = arith.constant 0 : index
    %c0_49 = arith.constant 0 : index
    %46 = vector.load %arg10[%c0_48, %c0_49] : memref<1x64xf32, #tpu.memory_space<vmem>>, vector<1x64xf32>
    %47 = vector.broadcast %46 : vector<1x64xf32> to vector<16x64xf32>
    %48 = arith.addf %45, %47 : vector<16x64xf32>
    %cst_50 = arith.constant 0.000000e+00 : f32
    %49 = vector.broadcast %cst_50 : f32 to vector<16x64xf32>
    %50 = arith.maximumf %48, %49 : vector<16x64xf32>
    %c0_51 = arith.constant 0 : index
    %c0_52 = arith.constant 0 : index
    %c0_53 = arith.constant 0 : index
    %51 = vector.load %arg11[%c0_51, %c0_52, %c0_53] : memref<1x16x64xf32, #tpu.memory_space<vmem>>, vector<1x16x64xf32>
    %52 = vector.shape_cast %51 : vector<1x16x64xf32> to vector<16x64xf32>
    %53 = vector.shape_cast %50 : vector<16x64xf32> to vector<1x16x64xf32>
    tpu.vector_store %arg11[%c0_51, %c0_52, %c0_53], %53 {strides = array<i32>} : memref<1x16x64xf32, #tpu.memory_space<vmem>>, vector<1x16x64xf32>,
    return
  }
  func.func @transform_0(%arg0: i32) -> (i32, i32, i32) {
    %c0_i32 = arith.constant 0 : i32
    %c0_i32_0 = arith.constant 0 : i32
    %c0_i32_1 = arith.constant 0 : i32
    return %arg0, %c0_i32, %c0_i32_0 : i32, i32, i32
  }
  func.func @transform_1(%arg0: i32) -> (i32, i32, i32) {
    %c0_i32 = arith.constant 0 : i32
    %c0_i32_0 = arith.constant 0 : i32
    %c0_i32_1 = arith.constant 0 : i32
    return %arg0, %c0_i32, %c0_i32_0 : i32, i32, i32
  }
  func.func @transform_2(%arg0: i32) -> (i32, i32) {
    %c0_i32 = arith.constant 0 : i32
    %c0_i32_0 = arith.constant 0 : i32
    %c0_i32_1 = arith.constant 0 : i32
    return %c0_i32, %c0_i32_0 : i32, i32
  }
  func.func @transform_3(%arg0: i32) -> (i32, i32) {
    %c0_i32 = arith.constant 0 : i32
    %c0_i32_0 = arith.constant 0 : i32
    %c0_i32_1 = arith.constant 0 : i32
    return %c0_i32, %c0_i32_0 : i32, i32
  }
  func.func @transform_4(%arg0: i32) -> (i32, i32) {
    %c0_i32 = arith.constant 0 : i32
    %c0_i32_0 = arith.constant 0 : i32
    %c0_i32_1 = arith.constant 0 : i32
    return %c0_i32, %c0_i32_0 : i32, i32
  }
  func.func @transform_5(%arg0: i32) -> (i32, i32, i32) {
    %c0_i32 = arith.constant 0 : i32
    %c0_i32_0 = arith.constant 0 : i32
    %c0_i32_1 = arith.constant 0 : i32
    %c0_i32_2 = arith.constant 0 : i32
    return %c0_i32, %c0_i32_0, %c0_i32_1 : i32, i32, i32
  }
  func.func @transform_6(%arg0: i32) -> (i32, i32, i32) {
    %c0_i32 = arith.constant 0 : i32
    %c0_i32_0 = arith.constant 0 : i32
    %c0_i32_1 = arith.constant 0 : i32
    %c0_i32_2 = arith.constant 0 : i32
    return %c0_i32, %c0_i32_0, %c0_i32_1 : i32, i32, i32
  }
  func.func @transform_7(%arg0: i32) -> (i32, i32) {
    %c0_i32 = arith.constant 0 : i32
    %c0_i32_0 = arith.constant 0 : i32
    %c0_i32_1 = arith.constant 0 : i32
    return %c0_i32, %c0_i32_0 : i32, i32
  }
  func.func @transform_8(%arg0: i32) -> (i32, i32, i32) {
    %c0_i32 = arith.constant 0 : i32
    %c0_i32_0 = arith.constant 0 : i32
    %c0_i32_1 = arith.constant 0 : i32
    %c0_i32_2 = arith.constant 0 : i32
    return %c0_i32, %c0_i32_0, %c0_i32_1 : i32, i32, i32
  }
  func.func @transform_9(%arg0: i32) -> (i32, i32) {
    %c0_i32 = arith.constant 0 : i32
    %c0_i32_0 = arith.constant 0 : i32
    %c0_i32_1 = arith.constant 0 : i32
    return %c0_i32, %c0_i32_0 : i32, i32
  }
  func.func @transform_10(%arg0: i32) -> (i32, i32, i32) {
    %c0_i32 = arith.constant 0 : i32
    %c0_i32_0 = arith.constant 0 : i32
    %c0_i32_1 = arith.constant 0 : i32
    return %arg0, %c0_i32, %c0_i32_0 : i32, i32, i32
  }
}

</mosaic_0001>

<llo_original>
// kernel: tile.13
$region0: #{tile.13}
  #allocation0 [shape = 's32[1]{0}', space=sflag, size = 0x4, scoped, tag = 'scoped memory for tile.13']
  %s0 = inlined_call_operand.vmem [shape: f32[4], index: 0, kind: input, shape index: {}]
  %s1 = inlined_call_operand.vmem [shape: f32[16,4], index: 1, kind: output, shape index: {}]
  // Predicated region
  $region2: #{tile.13} parent=0 // pred_check
    _
  $region3: #{tile.13} parent=0 // pred_check_branch
    %3 = sbr.rel (0) target = $region5
  $region4: #{tile.13} parent=0 // pred_region
    _
  $region5: #{tile.13} parent=0 // pred_fallthru
    _
  %v4 = vld [vmem:[%s0] ss:$0 sm:$0xff]
  %5 = vst [vmem:[%s1] sm:$0xff] %v4
  %s6 = scalar_lea.vmem %s1, 8
  %7 = vst [vmem:[%s6] sm:$0xff] %v4

// kernel: tile.14
$region0: #{tile.14}
  %s0 = inlined_call_operand.vmem [shape: f32[16,4], index: 0, kind: input, shape index: {}]
  %s1 = inlined_call_operand.vmem [shape: f32[1,64], index: 1, kind: output, shape index: {}]
  $region1: #{tile.14} parent=0
    #allocation0 [shape = 'u8[4096]{0}', space=vmem, size = 0x1000, scoped, tag = 'scoped mem for output reshape']
    %v2 = vld [vmem:[%s0] sm:$0x1]
    %vm3 = vcmask 31744
    %4 = vst.msk [vmem:[#allocation0] sm:$0x1] %vm3, %v2
    %s5 = scalar_lea.vmem %s0, 15
    %v6 = vld [vmem:[%s5] sm:$0x1]
    %7 = vrot.lane.b32.xlu0 %v6, 60
    %v8 = vpop.permute.xlu0 %7
    %vm9 = vcmask 523744
    %10 = vst.msk [vmem:[#allocation0] sm:$0x1] %vm9, %v8
    %s11 = scalar_lea.vmem %s0, 14
    %v12 = vld [vmem:[%s11] sm:$0x1]
    %13 = vrot.lane.b32.xlu0 %v12, 56
    %v14 = vpop.permute.xlu0 %13
    %vm15 = vcmask 490944
    %16 = vst.msk [vmem:[#allocation0] sm:$0x1] %vm15, %v14
    %s17 = scalar_lea.vmem %s0, 13
    %v18 = vld [vmem:[%s17] sm:$0x1]
    %19 = vrot.lane.b32.xlu0 %v18, 52
    %v20 = vpop.permute.xlu0 %19
    %vm21 = vcmask 458144
    %22 = vst.msk [vmem:[#allocation0] sm:$0x1] %vm21, %v20
    %s23 = scalar_lea.vmem %s0, 12
    %v24 = vld [vmem:[%s23] sm:$0x1]
    %25 = vrot.lane.b32.xlu0 %v24, 48
    %v26 = vpop.permute.xlu0 %25
    %vm27 = vcmask 425344
    %28 = vst.msk [vmem:[#allocation0] sm:$0x1] %vm27, %v26
    %s29 = scalar_lea.vmem %s0, 11
    %v30 = vld [vmem:[%s29] sm:$0x1]
    %31 = vrot.lane.b32.xlu0 %v30, 44
    %v32 = vpop.permute.xlu0 %31
    %vm33 = vcmask 392544
    %34 = vst.msk [vmem:[#allocation0] sm:$0x1] %vm33, %v32
    %s35 = scalar_lea.vmem %s0, 10
    %v36 = vld [vmem:[%s35] sm:$0x1]
    %37 = vrot.lane.b32.xlu0 %v36, 40
    %v38 = vpop.permute.xlu0 %37
    %vm39 = vcmask 359744
    %40 = vst.msk [vmem:[#allocation0] sm:$0x1] %vm39, %v38
    %s41 = scalar_lea.vmem %s0, 9
    %v42 = vld [vmem:[%s41] sm:$0x1]
    %43 = vrot.lane.b32.xlu0 %v42, 36
    %v44 = vpop.permute.xlu0 %43
    %vm45 = vcmask 326944
    %46 = vst.msk [vmem:[#allocation0] sm:$0x1] %vm45, %v44
    %s47 = scalar_lea.vmem %s0, 8
    %v48 = vld [vmem:[%s47] sm:$0x1]
    %49 = vrot.lane.b32.xlu0 %v48, 32
    %v50 = vpop.permute.xlu0 %49
    %vm51 = vcmask 294144
    %52 = vst.msk [vmem:[#allocation0] sm:$0x1] %vm51, %v50
    %s53 = scalar_lea.vmem %s0, 7
    %v54 = vld [vmem:[%s53] sm:$0x1]
    %55 = vrot.lane.b32.xlu0 %v54, 28
    %v56 = vpop.permute.xlu0 %55
    %vm57 = vcmask 261344
    %58 = vst.msk [vmem:[#allocation0] sm:$0x1] %vm57, %v56
    %s59 = scalar_lea.vmem %s0, 6
    %v60 = vld [vmem:[%s59] sm:$0x1]
    %61 = vrot.lane.b32.xlu0 %v60, 24
    %v62 = vpop.permute.xlu0 %61
    %vm63 = vcmask 228544
    %64 = vst.msk [vmem:[#allocation0] sm:$0x1] %vm63, %v62
    %s65 = scalar_lea.vmem %s0, 5
    %v66 = vld [vmem:[%s65] sm:$0x1]
    %67 = vrot.lane.b32.xlu0 %v66, 20
    %v68 = vpop.permute.xlu0 %67
    %vm69 = vcmask 195744
    %70 = vst.msk [vmem:[#allocation0] sm:$0x1] %vm69, %v68
    %s71 = scalar_lea.vmem %s0, 4
    %v72 = vld [vmem:[%s71] sm:$0x1]
    %73 = vrot.lane.b32.xlu0 %v72, 16
    %v74 = vpop.permute.xlu0 %73
    %vm75 = vcmask 162944
    %76 = vst.msk [vmem:[#allocation0] sm:$0x1] %vm75, %v74
    %s77 = scalar_lea.vmem %s0, 3
    %v78 = vld [vmem:[%s77] sm:$0x1]
    %79 = vrot.lane.b32.xlu0 %v78, 12
    %v80 = vpop.permute.xlu0 %79
    %vm81 = vcmask 130144
    %82 = vst.msk [vmem:[#allocation0] sm:$0x1] %vm81, %v80
    %s83 = scalar_lea.vmem %s0, 2
    %v84 = vld [vmem:[%s83] sm:$0x1]
    %85 = vrot.lane.b32.xlu0 %v84, 8
    %v86 = vpop.permute.xlu0 %85
    %vm87 = vcmask 97344
    %88 = vst.msk [vmem:[#allocation0] sm:$0x1] %vm87, %v86
    %s89 = scalar_lea.vmem %s0, 1
    %v90 = vld [vmem:[%s89] sm:$0x1]
    %91 = vrot.lane.b32.xlu0 %v90, 4
    %v92 = vpop.permute.xlu0 %91
    %vm93 = vcmask 64544
    %94 = vst.msk [vmem:[#allocation0] sm:$0x1] %vm93, %v92
    %s96 = sshllo.u32 0, 1
    %v98 = vld [vmem:[#allocation0] sm:%s96]
    %s99 = sshllo.u32 0, 1
    %100 = vst [vmem:[%s1] sm:%s99] %v98

// kernel: up_forward.1
$region0: #{up_forward.1}
  #allocation0 [shape = 'u32[]', space=smem, size = 0x4, offset = 0x4, fixed_abs, tag = 'smem constant byte address 0x4 - core index']
  #allocation1 [shape = 'u32[144,128]{1,0:T(1,128)}', space=vmem, size = 0x12000, scoped, tag = 'internal scratch']
  %s0 = inlined_call_operand.vmem [shape: f32[2,8,32], index: 0, kind: input, shape index: {}]
  %s1 = inlined_call_operand.vmem [shape: f32[2,16,64], index: 1, kind: input, shape index: {}]
  %s2 = inlined_call_operand.vmem [shape: f32[16,8], index: 2, kind: input, shape index: {}]
  %s3 = inlined_call_operand.vmem [shape: f32[32,128], index: 3, kind: input, shape index: {}]
  %s4 = inlined_call_operand.vmem [shape: f32[64,128], index: 4, kind: input, shape index: {}]
  %s5 = inlined_call_operand.vmem [shape: f32[3,16,16], index: 5, kind: input, shape index: {}]
  %s6 = inlined_call_operand.vmem [shape: f32[3,128,64], index: 6, kind: input, shape index: {}]
  %s7 = inlined_call_operand.vmem [shape: f32[1,64], index: 7, kind: input, shape index: {}]
  %s8 = inlined_call_operand.vmem [shape: f32[3,64,64], index: 8, kind: input, shape index: {}]
  %s9 = inlined_call_operand.vmem [shape: f32[1,64], index: 9, kind: input, shape index: {}]
  %s10 = inlined_call_operand.vmem [shape: f32[2,16,64], index: 10, kind: output, shape index: {}]
  %s11 = sld [smem:[#allocation0]]
  $region73: #{up_forward.1} parent=0
    _
  %s13 = ssub.s32 1, %s11
  %s14 = scalar_select 0, %s13, %s11
  loop: start=0, step=1, limit=4
  $region2: #{up_forward.1} parent=0 // loop_pre_header
    _
  $region3: #{up_forward.1} parent=0 // loop_header
    %s16 = sphi 0, %s20
    %p17 = scmp.ge.s32.totalorder %s16, 4
    %s26 = sphi 0, %s28
    %s29 = sphi 0, %s26
    %s30 = sphi 0, %s29
    %s46 = sphi 0, %s30
    %s52 = sphi 0, %s54
    %s55 = sphi 0, %s52
    %s56 = sphi 0, %s55
    %s72 = sphi 0, %s56
    %s76 = sphi 0, %s76
    %s78 = sphi 0, %s76
    %s79 = sphi 0, %s78
    %s93 = sphi 0, %s79
    %s97 = sphi 0, %s97
    %s99 = sphi 0, %s97
    %s100 = sphi 0, %s99
    %s114 = sphi 0, %s100
    %s118 = sphi 0, %s118
    %s120 = sphi 0, %s118
    %s121 = sphi 0, %s120
    %s135 = sphi 0, %s121
    %s139 = sphi 0, %s139
    %s141 = sphi 0, %s139
    %s142 = sphi 0, %s141
    %s156 = sphi 0, %s142
    %s160 = sphi 0, %s160
    %s162 = sphi 0, %s160
    %s163 = sphi 0, %s162
    %s177 = sphi 0, %s163
    %s181 = sphi 0, %s181
    %s183 = sphi 0, %s181
    %s184 = sphi 0, %s183
    %s198 = sphi 0, %s184
    %s202 = sphi 0, %s202
    %s204 = sphi 0, %s202
    %s205 = sphi 0, %s204
    %s219 = sphi 0, %s205
    %s223 = sphi 0, %s223
    %s225 = sphi 0, %s223
    %s226 = sphi 0, %s225
    %s240 = sphi 0, %s226
    %s246 = sphi 0, %s248
    %s249 = sphi 0, %s246
    %s250 = sphi 0, %s249
    %s266 = sphi 0, %s250
  $region4: #{up_forward.1} parent=0 // loop_header_branch
    %19 = sbr.rel (%p17) target = $region8
  $region5: #{up_forward.1} parent=0 // loop_body
    %s21 = ssub.s32 %s16, 1
    %s22 = ssub.s32 %s16, 2
    %s23 = sadd.s32 %s16, 1
    %s24 = ssub.s32 %s16, %s23
    %p25 = scmp.eq.s32.totalorder %s24, 0
    %s27 = sadd.s32 %s26, 1
    %s28 = scalar_select %p25, %s26, %s27
    %p31 = pneg %p25
    %p32 = scmp.eq.s32.totalorder %s16, 1
    %p33 = por %p31, %p32
    %p34 = scmp.ne.s32.totalorder %s26, %s29
    %p35 = scmp.eq.s32.totalorder %s16, 0
    %p36 = por %p34, %p35
    %p37 = scmp.ne.s32.totalorder %s26, %s29
    %p38 = scmp.eq.s32.totalorder %s21, 1
    %p39 = por %p37, %p38
    %p40 = scmp.ne.s32.totalorder %s29, %s30
    %p41 = scmp.eq.s32.totalorder %s21, 0
    %p42 = por %p40, %p41
    %p43 = scmp.ne.s32.totalorder %s29, %s30
    %p44 = scmp.eq.s32.totalorder %s22, 1
    %p45 = por %p43, %p44
    %p47 = scmp.ne.s32.totalorder %s30, %s46
    %p48 = scmp.eq.s32.totalorder %s22, 0
    %p49 = por %p47, %p48
    %s50 = ssub.s32 %s16, %s23
    %p51 = scmp.eq.s32.totalorder %s50, 0
    %s53 = sadd.s32 %s52, 1
    %s54 = scalar_select %p51, %s52, %s53
    %p57 = pneg %p51
    %p58 = scmp.eq.s32.totalorder %s16, 1
    %p59 = por %p57, %p58
    %p60 = scmp.ne.s32.totalorder %s52, %s55
    %p61 = scmp.eq.s32.totalorder %s16, 0
    %p62 = por %p60, %p61
    %p63 = scmp.ne.s32.totalorder %s52, %s55
    %p64 = scmp.eq.s32.totalorder %s21, 1
    %p65 = por %p63, %p64
    %p66 = scmp.ne.s32.totalorder %s55, %s56
    %p67 = scmp.eq.s32.totalorder %s21, 0
    %p68 = por %p66, %p67
    %p69 = scmp.ne.s32.totalorder %s55, %s56
    %p70 = scmp.eq.s32.totalorder %s22, 1
    %p71 = por %p69, %p70
    %p73 = scmp.ne.s32.totalorder %s56, %s72
    %p74 = scmp.eq.s32.totalorder %s22, 0
    %p75 = por %p73, %p74
    %s77 = sadd.s32 %s76, 1
    %p80 = scmp.eq.s32.totalorder %s16, 1
    %p81 = scmp.ne.s32.totalorder %s76, %s78
    %p82 = scmp.eq.s32.totalorder %s16, 0
    %p83 = por %p81, %p82
    %p84 = scmp.ne.s32.totalorder %s76, %s78
    %p85 = scmp.eq.s32.totalorder %s21, 1
    %p86 = por %p84, %p85
    %p87 = scmp.ne.s32.totalorder %s78, %s79
    %p88 = scmp.eq.s32.totalorder %s21, 0
    %p89 = por %p87, %p88
    %p90 = scmp.ne.s32.totalorder %s78, %s79
    %p91 = scmp.eq.s32.totalorder %s22, 1
    %p92 = por %p90, %p91
    %p94 = scmp.ne.s32.totalorder %s79, %s93
    %p95 = scmp.eq.s32.totalorder %s22, 0
    %p96 = por %p94, %p95
    %s98 = sadd.s32 %s97, 1
    %p101 = scmp.eq.s32.totalorder %s16, 1
    %p102 = scmp.ne.s32.totalorder %s97, %s99
    %p103 = scmp.eq.s32.totalorder %s16, 0
    %p104 = por %p102, %p103
    %p105 = scmp.ne.s32.totalorder %s97, %s99
    %p106 = scmp.eq.s32.totalorder %s21, 1
    %p107 = por %p105, %p106
    %p108 = scmp.ne.s32.totalorder %s99, %s100
    %p109 = scmp.eq.s32.totalorder %s21, 0
    %p110 = por %p108, %p109
    %p111 = scmp.ne.s32.totalorder %s99, %s100
    %p112 = scmp.eq.s32.totalorder %s22, 1
    %p113 = por %p111, %p112
    %p115 = scmp.ne.s32.totalorder %s100, %s114
    %p116 = scmp.eq.s32.totalorder %s22, 0
    %p117 = por %p115, %p116
    %s119 = sadd.s32 %s118, 1
    %p122 = scmp.eq.s32.totalorder %s16, 1
    %p123 = scmp.ne.s32.totalorder %s118, %s120
    %p124 = scmp.eq.s32.totalorder %s16, 0
    %p125 = por %p123, %p124
    %p126 = scmp.ne.s32.totalorder %s118, %s120
    %p127 = scmp.eq.s32.totalorder %s21, 1
    %p128 = por %p126, %p127
    %p129 = scmp.ne.s32.totalorder %s120, %s121
    %p130 = scmp.eq.s32.totalorder %s21, 0
    %p131 = por %p129, %p130
    %p132 = scmp.ne.s32.totalorder %s120, %s121
    %p133 = scmp.eq.s32.totalorder %s22, 1
    %p134 = por %p132, %p133
    %p136 = scmp.ne.s32.totalorder %s121, %s135
    %p137 = scmp.eq.s32.totalorder %s22, 0
    %p138 = por %p136, %p137
    %s140 = sadd.s32 %s139, 1
    %p143 = scmp.eq.s32.totalorder %s16, 1
    %p144 = scmp.ne.s32.totalorder %s139, %s141
    %p145 = scmp.eq.s32.totalorder %s16, 0
    %p146 = por %p144, %p145
    %p147 = scmp.ne.s32.totalorder %s139, %s141
    %p148 = scmp.eq.s32.totalorder %s21, 1
    %p149 = por %p147, %p148
    %p150 = scmp.ne.s32.totalorder %s141, %s142
    %p151 = scmp.eq.s32.totalorder %s21, 0
    %p152 = por %p150, %p151
    %p153 = scmp.ne.s32.totalorder %s141, %s142
    %p154 = scmp.eq.s32.totalorder %s22, 1
    %p155 = por %p153, %p154
    %p157 = scmp.ne.s32.totalorder %s142, %s156
    %p158 = scmp.eq.s32.totalorder %s22, 0
    %p159 = por %p157, %p158
    %s161 = sadd.s32 %s160, 1
    %p164 = scmp.eq.s32.totalorder %s16, 1
    %p165 = scmp.ne.s32.totalorder %s160, %s162
    %p166 = scmp.eq.s32.totalorder %s16, 0
    %p167 = por %p165, %p166
    %p168 = scmp.ne.s32.totalorder %s160, %s162
    %p169 = scmp.eq.s32.totalorder %s21, 1
    %p170 = por %p168, %p169
    %p171 = scmp.ne.s32.totalorder %s162, %s163
    %p172 = scmp.eq.s32.totalorder %s21, 0
    %p173 = por %p171, %p172
    %p174 = scmp.ne.s32.totalorder %s162, %s163
    %p175 = scmp.eq.s32.totalorder %s22, 1
    %p176 = por %p174, %p175
    %p178 = scmp.ne.s32.totalorder %s163, %s177
    %p179 = scmp.eq.s32.totalorder %s22, 0
    %p180 = por %p178, %p179
    %s182 = sadd.s32 %s181, 1
    %p185 = scmp.eq.s32.totalorder %s16, 1
    %p186 = scmp.ne.s32.totalorder %s181, %s183
    %p187 = scmp.eq.s32.totalorder %s16, 0
    %p188 = por %p186, %p187
    %p189 = scmp.ne.s32.totalorder %s181, %s183
    %p190 = scmp.eq.s32.totalorder %s21, 1
    %p191 = por %p189, %p190
    %p192 = scmp.ne.s32.totalorder %s183, %s184
    %p193 = scmp.eq.s32.totalorder %s21, 0
    %p194 = por %p192, %p193
    %p195 = scmp.ne.s32.totalorder %s183, %s184
    %p196 = scmp.eq.s32.totalorder %s22, 1
    %p197 = por %p195, %p196
    %p199 = scmp.ne.s32.totalorder %s184, %s198
    %p200 = scmp.eq.s32.totalorder %s22, 0
    %p201 = por %p199, %p200
    %s203 = sadd.s32 %s202, 1
    %p206 = scmp.eq.s32.totalorder %s16, 1
    %p207 = scmp.ne.s32.totalorder %s202, %s204
    %p208 = scmp.eq.s32.totalorder %s16, 0
    %p209 = por %p207, %p208
    %p210 = scmp.ne.s32.totalorder %s202, %s204
    %p211 = scmp.eq.s32.totalorder %s21, 1
    %p212 = por %p210, %p211
    %p213 = scmp.ne.s32.totalorder %s204, %s205
    %p214 = scmp.eq.s32.totalorder %s21, 0
    %p215 = por %p213, %p214
    %p216 = scmp.ne.s32.totalorder %s204, %s205
    %p217 = scmp.eq.s32.totalorder %s22, 1
    %p218 = por %p216, %p217
    %p220 = scmp.ne.s32.totalorder %s205, %s219
    %p221 = scmp.eq.s32.totalorder %s22, 0
    %p222 = por %p220, %p221
    %s224 = sadd.s32 %s223, 1
    %p227 = scmp.eq.s32.totalorder %s16, 1
    %p228 = scmp.ne.s32.totalorder %s223, %s225
    %p229 = scmp.eq.s32.totalorder %s16, 0
    %p230 = por %p228, %p229
    %p231 = scmp.ne.s32.totalorder %s223, %s225
    %p232 = scmp.eq.s32.totalorder %s21, 1
    %p233 = por %p231, %p232
    %p234 = scmp.ne.s32.totalorder %s225, %s226
    %p235 = scmp.eq.s32.totalorder %s21, 0
    %p236 = por %p234, %p235
    %p237 = scmp.ne.s32.totalorder %s225, %s226
    %p238 = scmp.eq.s32.totalorder %s22, 1
    %p239 = por %p237, %p238
    %p241 = scmp.ne.s32.totalorder %s226, %s240
    %p242 = scmp.eq.s32.totalorder %s22, 0
    %p243 = por %p241, %p242
    %s244 = ssub.s32 %s16, %s23
    %p245 = scmp.eq.s32.totalorder %s244, 0
    %s247 = sadd.s32 %s246, 1
    %s248 = scalar_select %p245, %s246, %s247
    %p251 = pneg %p245
    %p252 = scmp.eq.s32.totalorder %s16, 1
    %p253 = por %p251, %p252
    %p254 = scmp.ne.s32.totalorder %s246, %s249
    %p255 = scmp.eq.s32.totalorder %s16, 0
    %p256 = por %p254, %p255
    %p257 = scmp.ne.s32.totalorder %s246, %s249
    %p258 = scmp.eq.s32.totalorder %s21, 1
    %p259 = por %p257, %p258
    %p260 = scmp.ne.s32.totalorder %s249, %s250
    %p261 = scmp.eq.s32.totalorder %s21, 0
    %p262 = por %p260, %p261
    %p263 = scmp.ne.s32.totalorder %s249, %s250
    %p264 = scmp.eq.s32.totalorder %s22, 1
    %p265 = por %p263, %p264
    %p267 = scmp.ne.s32.totalorder %s250, %s266
    %p268 = scmp.eq.s32.totalorder %s22, 0
    %p269 = por %p267, %p268
    %p270 = scmp.le.s32.totalorder 1, %s16
    %p271 = scmp.lt.s32.totalorder %s16, 3
    %p272 = pnand %p270, %p271
    %p273 = pneg %p272
    // Predicated region
    $region9: #{up_forward.1} parent=5 // pred_check
      _
    $region10: #{up_forward.1} parent=5 // pred_check_branch
      %275 = sbr.rel (%p272) target = $region12
    $region11: #{up_forward.1} parent=5 // pred_region
      %s276 = ssub.s32 %s16, 1
      // Predicated region
      $region13: #{up_forward.1} parent=11 // pred_check
        %p277 = pneg %p89
      $region14: #{up_forward.1} parent=11 // pred_check_branch
        %279 = sbr.rel (%p277) target = $region16
      $region15: #{up_forward.1} parent=11 // pred_region
        _
      $region16: #{up_forward.1} parent=11 // pred_fallthru
        _
      // Predicated region
      $region17: #{up_forward.1} parent=11 // pred_check
        %p280 = pneg %p110
      $region18: #{up_forward.1} parent=11 // pred_check_branch
        %282 = sbr.rel (%p280) target = $region20
      $region19: #{up_forward.1} parent=11 // pred_region
        _
      $region20: #{up_forward.1} parent=11 // pred_fallthru
        _
      // Predicated region
      $region21: #{up_forward.1} parent=11 // pred_check
        %p283 = pneg %p131
      $region22: #{up_forward.1} parent=11 // pred_check_branch
        %285 = sbr.rel (%p283) target = $region24
      $region23: #{up_forward.1} parent=11 // pred_region
        _
      $region24: #{up_forward.1} parent=11 // pred_fallthru
        _
      // Predicated region
      $region25: #{up_forward.1} parent=11 // pred_check
        %p286 = pneg %p152
      $region26: #{up_forward.1} parent=11 // pred_check_branch
        %288 = sbr.rel (%p286) target = $region28
      $region27: #{up_forward.1} parent=11 // pred_region
        _
      $region28: #{up_forward.1} parent=11 // pred_fallthru
        _
      // Predicated region
      $region29: #{up_forward.1} parent=11 // pred_check
        %p289 = pneg %p173
      $region30: #{up_forward.1} parent=11 // pred_check_branch
        %291 = sbr.rel (%p289) target = $region32
      $region31: #{up_forward.1} parent=11 // pred_region
        _
      $region32: #{up_forward.1} parent=11 // pred_fallthru
        _
      // Predicated region
      $region33: #{up_forward.1} parent=11 // pred_check
        %p292 = pneg %p194
      $region34: #{up_forward.1} parent=11 // pred_check_branch
        %294 = sbr.rel (%p292) target = $region36
      $region35: #{up_forward.1} parent=11 // pred_region
        _
      $region36: #{up_forward.1} parent=11 // pred_fallthru
        _
      // Predicated region
      $region37: #{up_forward.1} parent=11 // pred_check
        %p295 = pneg %p215
      $region38: #{up_forward.1} parent=11 // pred_check_branch
        %297 = sbr.rel (%p295) target = $region40
      $region39: #{up_forward.1} parent=11 // pred_region
        _
      $region40: #{up_forward.1} parent=11 // pred_fallthru
        _
      // Predicated region
      $region41: #{up_forward.1} parent=11 // pred_check
        %p298 = pneg %p236
      $region42: #{up_forward.1} parent=11 // pred_check_branch
        %300 = sbr.rel (%p298) target = $region44
      $region43: #{up_forward.1} parent=11 // pred_region
        _
      $region44: #{up_forward.1} parent=11 // pred_fallthru
        _
    $region12: #{up_forward.1} parent=5 // pred_fallthru
      _
    %p301 = scmp.lt.s32.totalorder %s16, 2
    // Predicated region
    $region45: #{up_forward.1} parent=5 // pred_check
      %p302 = pneg %p301
    $region46: #{up_forward.1} parent=5 // pred_check_branch
      %304 = sbr.rel (%p302) target = $region48
    $region47: #{up_forward.1} parent=5 // pred_region
      // Predicated region
      $region49: #{up_forward.1} parent=47 // pred_check
        %p305 = pneg %p36
      $region50: #{up_forward.1} parent=47 // pred_check_branch
        %307 = sbr.rel (%p305) target = $region52
      $region51: #{up_forward.1} parent=47 // pred_region
        %p308 = scmp.lt.s32.totalorder %s16, 1
        %s309 = scalar_select %p308, %s16, 1
        %s310 = smul.addr %s309, 8
        %s311 = scalar_lea.vmem %s0, %s310
      $region52: #{up_forward.1} parent=47 // pred_fallthru
        _
      // Predicated region
      $region53: #{up_forward.1} parent=47 // pred_check
        %p312 = pneg %p62
      $region54: #{up_forward.1} parent=47 // pred_check_branch
        %314 = sbr.rel (%p312) target = $region56
      $region55: #{up_forward.1} parent=47 // pred_region
        %p315 = scmp.lt.s32.totalorder %s16, 1
        %s316 = scalar_select %p315, %s16, 1
        %s317 = smul.addr %s316, 2
        %s318 = smul.addr %s317, 8
        %s319 = scalar_lea.vmem %s1, %s318
      $region56: #{up_forward.1} parent=47 // pred_fallthru
        _
    $region48: #{up_forward.1} parent=5 // pred_fallthru
      _
    %p320 = scmp.le.s32.totalorder 1, %s16
    %p321 = scmp.lt.s32.totalorder %s16, 3
    %p322 = pnand %p320, %p321
    %p323 = pneg %p322
    // Predicated region
    $region57: #{up_forward.1} parent=5 // pred_check
      _
    $region58: #{up_forward.1} parent=5 // pred_check_branch
      %325 = sbr.rel (%p322) target = $region60
    $region59: #{up_forward.1} parent=5 // pred_region
      %s326 = ssub.s32 %s16, 1
      %p327 = scmp.lt.s32.totalorder %s21, 1
      %s328 = scalar_select %p327, %s21, 1
      %s329 = smul.addr %s328, 8
      %s330 = scalar_lea.vmem %s0, %s329
      %p331 = pneg %p42
      %p332 = pneg %p39
      %p333 = scmp.lt.s32.totalorder %s21, 1
      %s334 = scalar_select %p333, %s21, 1
      %s335 = smul.addr %s334, 2
      %s336 = smul.addr %s335, 8
      %s337 = scalar_lea.vmem %s1, %s336
      %p338 = pneg %p68
      %p339 = pneg %p65
      %p340 = pneg %p89
      %p341 = pneg %p86
      %p342 = pneg %p110
      %p343 = pneg %p107
      %p344 = pneg %p131
      %p345 = pneg %p128
      %p346 = pneg %p152
      %p347 = pneg %p149
      %p348 = pneg %p173
      %p349 = pneg %p170
      %p350 = pneg %p194
      %p351 = pneg %p191
      %p352 = pneg %p215
      %p353 = pneg %p212
      %p354 = pneg %p236
      %p355 = pneg %p233
      %p356 = pneg %p262
      %p357 = pneg %p259
      %p358 = scmp.lt.s32.totalorder %s21, 1
      %s359 = scalar_select %p358, %s21, 1
      %s360 = smul.addr %s359, 2
      %s361 = smul.addr %s360, 8
      %s362 = scalar_lea.vmem %s10, %s361
      %p363 = scmp.lt.s32.totalorder %s21, 1
      %s364 = scalar_select %p363, %s21, 1
      %s365 = smul.addr %s364, 8
      %s366 = scalar_lea.vmem %s0, %s365
      %p367 = scmp.lt.s32.totalorder %s21, 1
      %s368 = scalar_select %p367, %s21, 1
      %s369 = smul.addr %s368, 2
      %s370 = smul.addr %s369, 8
      %s371 = scalar_lea.vmem %s1, %s370
      %p372 = scmp.lt.s32.totalorder %s21, 1
      %s373 = scalar_select %p372, %s21, 1
      %s374 = smul.addr %s373, 2
      %s375 = smul.addr %s374, 8
      %s376 = scalar_lea.vmem %s10, %s375
      %v377 = vld [vmem:[%s2] sm:$0xff]
      %v378 = vld [vmem:[%s2 + $0x8] sm:$0xff]
      %v379 = vld [vmem:[%s366] sm:$0xff]
      %vm380 = vcmask 64512
      %v382 = vsel %vm380, %v377, 0
      %v385 = vsel %vm380, %v378, 0
      %387 = vmatprep.subr.mxu0 0.0
      %388 = vmatpush1.msra.mxu0 %v379
      %389 = vmatprep.subr.mxu0 0.0
      %390 = vmatpush1.msra.mxu0 0.0
      %391 = vmatprep.subr.mxu0 0.0
      %392 = vmatpush1.msra.mxu0 0.0
      %393 = vmatprep.subr.mxu0 0.0
      %394 = vmatpush1.msra.mxu0 0.0
      %395 = vmatprep.subr.mxu0 0.0
      %396 = vmatpush1.msra.mxu0 0.0
      %397 = vmatprep.subr.mxu0 0.0
      %398 = vmatpush1.msra.mxu0 0.0
      %399 = vmatprep.subr.mxu0 0.0
      %400 = vmatpush1.msra.mxu0 0.0
      %401 = vmatprep.subr.mxu0 0.0
      %402 = vmatpush1.msra.mxu0 0.0
      %403 = vmatprep.subr.mxu0 0.0
      %404 = vmatpush1.msra.mxu0 0.0
      %405 = vmatprep.subr.mxu0 0.0
      %406 = vmatpush1.msra.mxu0 0.0
      %407 = vmatprep.subr.mxu0 0.0
      %408 = vmatpush1.msra.mxu0 0.0
      %409 = vmatprep.subr.mxu0 0.0
      %410 = vmatpush1.msra.mxu0 0.0
      %411 = vmatprep.subr.mxu0 0.0
      %412 = vmatpush1.msra.mxu0 0.0
      %413 = vmatprep.subr.mxu0 0.0
      %414 = vmatpush1.msra.mxu0 0.0
      %415 = vmatprep.subr.mxu0 0.0
      %416 = vmatpush1.msra.mxu0 0.0
      %417 = vmatprep.subr.mxu0 0.0
      %418 = vmatpush1.msra.mxu0 0.0
      %419 = vmatprep.subr.mxu0 0.0
      %420 = vmatpush1.msra.mxu0 0.0
      %421 = vmatprep.subr.mxu0 0.0
      %422 = vmatpush1.msra.mxu0 0.0
      %423 = vmatprep.subr.mxu0 0.0
      %424 = vmatpush1.msra.mxu0 0.0
      %425 = vmatprep.subr.mxu0 0.0
      %426 = vmatpush1.msra.mxu0 0.0
      %427 = vmatprep.subr.mxu0 0.0
      %428 = vmatpush1.msra.mxu0 0.0
      %429 = vmatprep.subr.mxu0 0.0
      %430 = vmatpush1.msra.mxu0 0.0
      %431 = vmatprep.subr.mxu0 0.0
      %432 = vmatpush1.msra.mxu0 0.0
      %433 = vmatprep.subr.mxu0 0.0
      %434 = vmatpush1.msra.mxu0 0.0
      %435 = vmatprep.subr.mxu0 0.0
      %436 = vmatpush1.msra.mxu0 0.0
      %437 = vmatprep.subr.mxu0 0.0
      %438 = vmatpush1.msra.mxu0 0.0
      %439 = vmatprep.subr.mxu0 0.0
      %440 = vmatpush1.msra.mxu0 0.0
      %441 = vmatprep.subr.mxu0 0.0
      %442 = vmatpush1.msra.mxu0 0.0
      %443 = vmatprep.subr.mxu0 0.0
      %444 = vmatpush1.msra.mxu0 0.0
      %445 = vmatprep.subr.mxu0 0.0
      %446 = vmatpush1.msra.mxu0 0.0
      %447 = vmatprep.subr.mxu0 0.0
      %448 = vmatpush1.msra.mxu0 0.0
      %449 = vmatprep.subr.mxu0 0.0
      %450 = vmatpush1.msra.mxu0 0.0
      %451 = vmatprep.mubr.f32.mxu0 0.0
      %452 = vmatmul.mubr.f32.gmra.mrb[0].mxu0 %v382
      %v453 = vpop.f32.mrb[0].mxu0
      %v454 = vadd.f32 0.0, %v453
      %v455 = vpop.f32.mrb[0].mxu0
      %456 = vmatprep.mubr.f32.mxu0 0.0
      %457 = vmatmul.mubr.f32.gmra.mrb[0].mxu0 %v385
      %v458 = vpop.f32.mrb[0].mxu0
      %v459 = vadd.f32 0.0, %v458
      %v460 = vpop.f32.mrb[0].mxu0
      %461 = vdwg.mxu0
      %v462 = vld [vmem:[%s3] sm:$0xff]
      %v463 = vld [vmem:[%s3 + $0x8] sm:$0xff]
      %v464 = vld [vmem:[%s3 + $0x10] sm:$0xff]
      %v465 = vld [vmem:[%s3 + $0x18] sm:$0xff]
      %v466 = vld [vmem:[%s371] sm:$0xff]
      %v467 = vld [vmem:[%s371 + $0x8] sm:$0xff]
      %v468 = vld [vmem:[%s4] sm:$0xff]
      %v469 = vld [vmem:[%s4 + $0x8] sm:$0xff]
      %v470 = vld [vmem:[%s4 + $0x10] sm:$0xff]
      %v471 = vld [vmem:[%s4 + $0x18] sm:$0xff]
      %v472 = vld [vmem:[%s4 + $0x20] sm:$0xff]
      %v473 = vld [vmem:[%s4 + $0x28] sm:$0xff]
      %v474 = vld [vmem:[%s4 + $0x30] sm:$0xff]
      %v475 = vld [vmem:[%s4 + $0x38] sm:$0xff]
      %vm476 = vcmask 523264
      %v478 = vsel %vm476, %v466, 0
      %v481 = vsel %vm476, %v467, 0
      %483 = vmatprep.subr.mxu0 0.0
      %484 = vmatpush1.msra.mxu0 %v468
      %485 = vmatprep.subr.mxu0 0.0
      %486 = vmatpush1.msra.mxu0 %v469
      %487 = vmatprep.subr.mxu0 0.0
      %488 = vmatpush1.msra.mxu0 %v470
      %489 = vmatprep.subr.mxu0 0.0
      %490 = vmatpush1.msra.mxu0 %v471
      %491 = vmatprep.subr.mxu0 0.0
      %492 = vmatpush1.msra.mxu0 %v472
      %493 = vmatprep.subr.mxu0 0.0
      %494 = vmatpush1.msra.mxu0 %v473
      %495 = vmatprep.subr.mxu0 0.0
      %496 = vmatpush1.msra.mxu0 %v474
      %497 = vmatprep.subr.mxu0 0.0
      %498 = vmatpush1.msra.mxu0 %v475
      %499 = vmatprep.subr.mxu0 0.0
      %500 = vmatpush1.msra.mxu0 0.0
      %501 = vmatprep.subr.mxu0 0.0
      %502 = vmatpush1.msra.mxu0 0.0
      %503 = vmatprep.subr.mxu0 0.0
      %504 = vmatpush1.msra.mxu0 0.0
      %505 = vmatprep.subr.mxu0 0.0
      %506 = vmatpush1.msra.mxu0 0.0
      %507 = vmatprep.subr.mxu0 0.0
      %508 = vmatpush1.msra.mxu0 0.0
      %509 = vmatprep.subr.mxu0 0.0
      %510 = vmatpush1.msra.mxu0 0.0
      %511 = vmatprep.subr.mxu0 0.0
      %512 = vmatpush1.msra.mxu0 0.0
      %513 = vmatprep.subr.mxu0 0.0
      %514 = vmatpush1.msra.mxu0 0.0
      %515 = vmatprep.subr.mxu0 0.0
      %516 = vmatpush1.msra.mxu0 0.0
      %517 = vmatprep.subr.mxu0 0.0
      %518 = vmatpush1.msra.mxu0 0.0
      %519 = vmatprep.subr.mxu0 0.0
      %520 = vmatpush1.msra.mxu0 0.0
      %521 = vmatprep.subr.mxu0 0.0
      %522 = vmatpush1.msra.mxu0 0.0
      %523 = vmatprep.subr.mxu0 0.0
      %524 = vmatpush1.msra.mxu0 0.0
      %525 = vmatprep.subr.mxu0 0.0
      %526 = vmatpush1.msra.mxu0 0.0
      %527 = vmatprep.subr.mxu0 0.0
      %528 = vmatpush1.msra.mxu0 0.0
      %529 = vmatprep.subr.mxu0 0.0
      %530 = vmatpush1.msra.mxu0 0.0
      %531 = vmatprep.subr.mxu0 0.0
      %532 = vmatpush1.msra.mxu0 0.0
      %533 = vmatprep.subr.mxu0 0.0
      %534 = vmatpush1.msra.mxu0 0.0
      %535 = vmatprep.subr.mxu0 0.0
      %536 = vmatpush1.msra.mxu0 0.0
      %537 = vmatprep.subr.mxu0 0.0
      %538 = vmatpush1.msra.mxu0 0.0
      %539 = vmatprep.subr.mxu0 0.0
      %540 = vmatpush1.msra.mxu0 0.0
      %541 = vmatprep.subr.mxu0 0.0
      %542 = vmatpush1.msra.mxu0 0.0
      %543 = vmatprep.subr.mxu0 0.0
      %544 = vmatpush1.msra.mxu0 0.0
      %545 = vmatprep.subr.mxu0 0.0
      %546 = vmatpush1.msra.mxu0 0.0
      %547 = vmatprep.mubr.f32.mxu0 0.0
      %548 = vmatmul.mubr.f32.gmra.mrb[0].mxu0 %v478
      %v549 = vpop.f32.mrb[0].mxu0
      %v550 = vadd.f32 0.0, %v549
      %v551 = vpop.f32.mrb[0].mxu0
      %552 = vmatprep.mubr.f32.mxu0 0.0
      %553 = vmatmul.mubr.f32.gmra.mrb[0].mxu0 %v481
      %v554 = vpop.f32.mrb[0].mxu0
      %v555 = vadd.f32 0.0, %v554
      %v556 = vpop.f32.mrb[0].mxu0
      %557 = vdwg.mxu0
      %vm558 = vcmask 261120
      %v560 = vsel %vm558, %v454, 0
      %v563 = vsel %vm558, %v459, 0
      %565 = vmatprep.subr.mxu0 0.0
      %566 = vmatpush1.msra.mxu0 %v462
      %567 = vmatprep.subr.mxu0 0.0
      %568 = vmatpush1.msra.mxu0 %v463
      %569 = vmatprep.subr.mxu0 0.0
      %570 = vmatpush1.msra.mxu0 %v464
      %571 = vmatprep.subr.mxu0 0.0
      %572 = vmatpush1.msra.mxu0 %v465
      %573 = vmatprep.subr.mxu0 0.0
      %574 = vmatpush1.msra.mxu0 0.0
      %575 = vmatprep.subr.mxu0 0.0
      %576 = vmatpush1.msra.mxu0 0.0
      %577 = vmatprep.subr.mxu0 0.0
      %578 = vmatpush1.msra.mxu0 0.0
      %579 = vmatprep.subr.mxu0 0.0
      %580 = vmatpush1.msra.mxu0 0.0
      %581 = vmatprep.subr.mxu0 0.0
      %582 = vmatpush1.msra.mxu0 0.0
      %583 = vmatprep.subr.mxu0 0.0
      %584 = vmatpush1.msra.mxu0 0.0
      %585 = vmatprep.subr.mxu0 0.0
      %586 = vmatpush1.msra.mxu0 0.0
      %587 = vmatprep.subr.mxu0 0.0
      %588 = vmatpush1.msra.mxu0 0.0
      %589 = vmatprep.subr.mxu0 0.0
      %590 = vmatpush1.msra.mxu0 0.0
      %591 = vmatprep.subr.mxu0 0.0
      %592 = vmatpush1.msra.mxu0 0.0
      %593 = vmatprep.subr.mxu0 0.0
      %594 = vmatpush1.msra.mxu0 0.0
      %595 = vmatprep.subr.mxu0 0.0
      %596 = vmatpush1.msra.mxu0 0.0
      %597 = vmatprep.subr.mxu0 0.0
      %598 = vmatpush1.msra.mxu0 0.0
      %599 = vmatprep.subr.mxu0 0.0
      %600 = vmatpush1.msra.mxu0 0.0
      %601 = vmatprep.subr.mxu0 0.0
      %602 = vmatpush1.msra.mxu0 0.0
      %603 = vmatprep.subr.mxu0 0.0
      %604 = vmatpush1.msra.mxu0 0.0
      %605 = vmatprep.subr.mxu0 0.0
      %606 = vmatpush1.msra.mxu0 0.0
      %607 = vmatprep.subr.mxu0 0.0
      %608 = vmatpush1.msra.mxu0 0.0
      %609 = vmatprep.subr.mxu0 0.0
      %610 = vmatpush1.msra.mxu0 0.0
      %611 = vmatprep.subr.mxu0 0.0
      %612 = vmatpush1.msra.mxu0 0.0
      %613 = vmatprep.subr.mxu0 0.0
      %614 = vmatpush1.msra.mxu0 0.0
      %615 = vmatprep.subr.mxu0 0.0
      %616 = vmatpush1.msra.mxu0 0.0
      %617 = vmatprep.subr.mxu0 0.0
      %618 = vmatpush1.msra.mxu0 0.0
      %619 = vmatprep.subr.mxu0 0.0
      %620 = vmatpush1.msra.mxu0 0.0
      %621 = vmatprep.subr.mxu0 0.0
      %622 = vmatpush1.msra.mxu0 0.0
      %623 = vmatprep.subr.mxu0 0.0
      %624 = vmatpush1.msra.mxu0 0.0
      %625 = vmatprep.subr.mxu0 0.0
      %626 = vmatpush1.msra.mxu0 0.0
      %627 = vmatprep.subr.mxu0 0.0
      %628 = vmatpush1.msra.mxu0 0.0
      %629 = vmatprep.mubr.f32.mxu0 0.0
      %630 = vmatmul.mubr.f32.gmra.mrb[0].mxu0 %v560
      %v631 = vpop.f32.mrb[0].mxu0
      %v632 = vadd.f32 %v550, %v631
      %v633 = vpop.f32.mrb[0].mxu0
      %634 = vmatprep.mubr.f32.mxu0 0.0
      %635 = vmatmul.mubr.f32.gmra.mrb[0].mxu0 %v563
      %v636 = vpop.f32.mrb[0].mxu0
      %v637 = vadd.f32 %v555, %v636
      %v638 = vpop.f32.mrb[0].mxu0
      %639 = vdwg.mxu0
      %v640 = vld [vmem:[%s5] sm:$0xff]
      %v641 = vld [vmem:[%s5 + $0x8] sm:$0xff]
      %s642 = scalar_lea.vmem %s5, 32
      %v643 = vld [vmem:[%s642] sm:$0xff]
      %v644 = vld [vmem:[%s642 + $0x8] sm:$0xff]
      %vm645 = vcmask 130048
      %v647 = vsel %vm645, %v640, 0
      %v650 = vsel %vm645, %v641, 0
      %652 = vmatprep.subr.mxu0 0.0
      %653 = vmatpush1.msra.mxu0 %v632
      %654 = vmatprep.subr.mxu0 0.0
      %655 = vmatpush1.msra.mxu0 %v637
      %656 = vmatprep.subr.mxu0 0.0
      %657 = vmatpush1.msra.mxu0 0.0
      %658 = vmatprep.subr.mxu0 0.0
      %659 = vmatpush1.msra.mxu0 0.0
      %660 = vmatprep.subr.mxu0 0.0
      %661 = vmatpush1.msra.mxu0 0.0
      %662 = vmatprep.subr.mxu0 0.0
      %663 = vmatpush1.msra.mxu0 0.0
      %664 = vmatprep.subr.mxu0 0.0
      %665 = vmatpush1.msra.mxu0 0.0
      %666 = vmatprep.subr.mxu0 0.0
      %667 = vmatpush1.msra.mxu0 0.0
      %668 = vmatprep.subr.mxu0 0.0
      %669 = vmatpush1.msra.mxu0 0.0
      %670 = vmatprep.subr.mxu0 0.0
      %671 = vmatpush1.msra.mxu0 0.0
      %672 = vmatprep.subr.mxu0 0.0
      %673 = vmatpush1.msra.mxu0 0.0
      %674 = vmatprep.subr.mxu0 0.0
      %675 = vmatpush1.msra.mxu0 0.0
      %676 = vmatprep.subr.mxu0 0.0
      %677 = vmatpush1.msra.mxu0 0.0
      %678 = vmatprep.subr.mxu0 0.0
      %679 = vmatpush1.msra.mxu0 0.0
      %680 = vmatprep.subr.mxu0 0.0
      %681 = vmatpush1.msra.mxu0 0.0
      %682 = vmatprep.subr.mxu0 0.0
      %683 = vmatpush1.msra.mxu0 0.0
      %684 = vmatprep.subr.mxu0 0.0
      %685 = vmatpush1.msra.mxu0 0.0
      %686 = vmatprep.subr.mxu0 0.0
      %687 = vmatpush1.msra.mxu0 0.0
      %688 = vmatprep.subr.mxu0 0.0
      %689 = vmatpush1.msra.mxu0 0.0
      %690 = vmatprep.subr.mxu0 0.0
      %691 = vmatpush1.msra.mxu0 0.0
      %692 = vmatprep.subr.mxu0 0.0
      %693 = vmatpush1.msra.mxu0 0.0
      %694 = vmatprep.subr.mxu0 0.0
      %695 = vmatpush1.msra.mxu0 0.0
      %696 = vmatprep.subr.mxu0 0.0
      %697 = vmatpush1.msra.mxu0 0.0
      %698 = vmatprep.subr.mxu0 0.0
      %699 = vmatpush1.msra.mxu0 0.0
      %700 = vmatprep.subr.mxu0 0.0
      %701 = vmatpush1.msra.mxu0 0.0
      %702 = vmatprep.subr.mxu0 0.0
      %703 = vmatpush1.msra.mxu0 0.0
      %704 = vmatprep.subr.mxu0 0.0
      %705 = vmatpush1.msra.mxu0 0.0
      %706 = vmatprep.subr.mxu0 0.0
      %707 = vmatpush1.msra.mxu0 0.0
      %708 = vmatprep.subr.mxu0 0.0
      %709 = vmatpush1.msra.mxu0 0.0
      %710 = vmatprep.subr.mxu0 0.0
      %711 = vmatpush1.msra.mxu0 0.0
      %712 = vmatprep.subr.mxu0 0.0
      %713 = vmatpush1.msra.mxu0 0.0
      %714 = vmatprep.subr.mxu0 0.0
      %715 = vmatpush1.msra.mxu0 0.0
      %716 = vmatprep.mubr.f32.mxu0 0.0
      %717 = vmatmul.mubr.f32.gmra.mrb[0].mxu0 %v647
      %v718 = vpop.f32.mrb[0].mxu0
      %v719 = vadd.f32 0.0, %v718
      %v720 = vpop.f32.mrb[0].mxu0
      %721 = vmatprep.mubr.f32.mxu0 0.0
      %722 = vmatmul.mubr.f32.gmra.mrb[0].mxu0 %v650
      %v723 = vpop.f32.mrb[0].mxu0
      %v724 = vadd.f32 0.0, %v723
      %v725 = vpop.f32.mrb[0].mxu0
      %726 = vdwg.mxu0
      %v727 = vld [vmem:[%s6] sm:$0xff]
      %v728 = vld [vmem:[%s6 + $0x8] sm:$0xff]
      %v729 = vld [vmem:[%s6 + $0x10] sm:$0xff]
      %v730 = vld [vmem:[%s6 + $0x18] sm:$0xff]
      %v731 = vld [vmem:[%s6 + $0x20] sm:$0xff]
      %v732 = vld [vmem:[%s6 + $0x28] sm:$0xff]
      %v733 = vld [vmem:[%s6 + $0x30] sm:$0xff]
      %v734 = vld [vmem:[%s6 + $0x38] sm:$0xff]
      %v735 = vld [vmem:[%s6 + $0x40] sm:$0xff]
      %v736 = vld [vmem:[%s6 + $0x48] sm:$0xff]
      %v737 = vld [vmem:[%s6 + $0x50] sm:$0xff]
      %v738 = vld [vmem:[%s6 + $0x58] sm:$0xff]
      %v739 = vld [vmem:[%s6 + $0x60] sm:$0xff]
      %v740 = vld [vmem:[%s6 + $0x68] sm:$0xff]
      %v741 = vld [vmem:[%s6 + $0x70] sm:$0xff]
      %v742 = vld [vmem:[%s6 + $0x78] sm:$0xff]
      %s743 = scalar_lea.vmem %s6, 128
      %v744 = vld [vmem:[%s743] sm:$0xff]
      %v745 = vld [vmem:[%s743 + $0x8] sm:$0xff]
      %v746 = vld [vmem:[%s743 + $0x10] sm:$0xff]
      %v747 = vld [vmem:[%s743 + $0x18] sm:$0xff]
      %v748 = vld [vmem:[%s743 + $0x20] sm:$0xff]
      %v749 = vld [vmem:[%s743 + $0x28] sm:$0xff]
      %v750 = vld [vmem:[%s743 + $0x30] sm:$0xff]
      %v751 = vld [vmem:[%s743 + $0x38] sm:$0xff]
      %v752 = vld [vmem:[%s743 + $0x40] sm:$0xff]
      %v753 = vld [vmem:[%s743 + $0x48] sm:$0xff]
      %v754 = vld [vmem:[%s743 + $0x50] sm:$0xff]
      %v755 = vld [vmem:[%s743 + $0x58] sm:$0xff]
      %v756 = vld [vmem:[%s743 + $0x60] sm:$0xff]
      %v757 = vld [vmem:[%s743 + $0x68] sm:$0xff]
      %v758 = vld [vmem:[%s743 + $0x70] sm:$0xff]
      %v759 = vld [vmem:[%s743 + $0x78] sm:$0xff]
      %760 = vmatprep.subr.mxu0 0.0
      %761 = vmatpush1.msra.mxu0 %v744
      %762 = vmatprep.subr.mxu0 0.0
      %763 = vmatpush1.msra.mxu0 %v745
      %764 = vmatprep.subr.mxu0 0.0
      %765 = vmatpush1.msra.mxu0 %v746
      %766 = vmatprep.subr.mxu0 0.0
      %767 = vmatpush1.msra.mxu0 %v747
      %768 = vmatprep.subr.mxu0 0.0
      %769 = vmatpush1.msra.mxu0 %v748
      %770 = vmatprep.subr.mxu0 0.0
      %771 = vmatpush1.msra.mxu0 %v749
      %772 = vmatprep.subr.mxu0 0.0
      %773 = vmatpush1.msra.mxu0 %v750
      %774 = vmatprep.subr.mxu0 0.0
      %775 = vmatpush1.msra.mxu0 %v751
      %776 = vmatprep.subr.mxu0 0.0
      %777 = vmatpush1.msra.mxu0 %v752
      %778 = vmatprep.subr.mxu0 0.0
      %779 = vmatpush1.msra.mxu0 %v753
      %780 = vmatprep.subr.mxu0 0.0
      %781 = vmatpush1.msra.mxu0 %v754
      %782 = vmatprep.subr.mxu0 0.0
      %783 = vmatpush1.msra.mxu0 %v755
      %784 = vmatprep.subr.mxu0 0.0
      %785 = vmatpush1.msra.mxu0 %v756
      %786 = vmatprep.subr.mxu0 0.0
      %787 = vmatpush1.msra.mxu0 %v757
      %788 = vmatprep.subr.mxu0 0.0
      %789 = vmatpush1.msra.mxu0 %v758
      %790 = vmatprep.subr.mxu0 0.0
      %791 = vmatpush1.msra.mxu0 %v759
      %792 = vmatprep.subr.mxu0 0.0
      %793 = vmatpush1.msra.mxu0 0.0
      %794 = vmatprep.subr.mxu0 0.0
      %795 = vmatpush1.msra.mxu0 0.0
      %796 = vmatprep.subr.mxu0 0.0
      %797 = vmatpush1.msra.mxu0 0.0
      %798 = vmatprep.subr.mxu0 0.0
      %799 = vmatpush1.msra.mxu0 0.0
      %800 = vmatprep.subr.mxu0 0.0
      %801 = vmatpush1.msra.mxu0 0.0
      %802 = vmatprep.subr.mxu0 0.0
      %803 = vmatpush1.msra.mxu0 0.0
      %804 = vmatprep.subr.mxu0 0.0
      %805 = vmatpush1.msra.mxu0 0.0
      %806 = vmatprep.subr.mxu0 0.0
      %807 = vmatpush1.msra.mxu0 0.0
      %808 = vmatprep.subr.mxu0 0.0
      %809 = vmatpush1.msra.mxu0 0.0
      %810 = vmatprep.subr.mxu0 0.0
      %811 = vmatpush1.msra.mxu0 0.0
      %812 = vmatprep.subr.mxu0 0.0
      %813 = vmatpush1.msra.mxu0 0.0
      %814 = vmatprep.subr.mxu0 0.0
      %815 = vmatpush1.msra.mxu0 0.0
      %816 = vmatprep.subr.mxu0 0.0
      %817 = vmatpush1.msra.mxu0 0.0
      %818 = vmatprep.subr.mxu0 0.0
      %819 = vmatpush1.msra.mxu0 0.0
      %820 = vmatprep.subr.mxu0 0.0
      %821 = vmatpush1.msra.mxu0 0.0
      %822 = vmatprep.subr.mxu0 0.0
      %823 = vmatpush1.msra.mxu0 0.0
      %824 = vmatprep.mubr.f32.mxu0 0.0
      %825 = vmatmul.mubr.f32.gmra.mrb[0].mxu0 %v632
      %v826 = vpop.f32.mrb[0].mxu0
      %v827 = vadd.f32 0.0, %v826
      %v828 = vpop.f32.mrb[0].mxu0
      %829 = vmatprep.mubr.f32.mxu0 0.0
      %830 = vmatmul.mubr.f32.gmra.mrb[0].mxu0 %v637
      %v831 = vpop.f32.mrb[0].mxu0
      %v832 = vadd.f32 0.0, %v831
      %v833 = vpop.f32.mrb[0].mxu0
      %834 = vdwg.mxu0
      %835 = vmatprep.subr.mxu0 0.0
      %836 = vmatpush1.msra.mxu0 %v727
      %837 = vmatprep.subr.mxu0 0.0
      %838 = vmatpush1.msra.mxu0 %v728
      %839 = vmatprep.subr.mxu0 0.0
      %840 = vmatpush1.msra.mxu0 %v729
      %841 = vmatprep.subr.mxu0 0.0
      %842 = vmatpush1.msra.mxu0 %v730
      %843 = vmatprep.subr.mxu0 0.0
      %844 = vmatpush1.msra.mxu0 %v731
      %845 = vmatprep.subr.mxu0 0.0
      %846 = vmatpush1.msra.mxu0 %v732
      %847 = vmatprep.subr.mxu0 0.0
      %848 = vmatpush1.msra.mxu0 %v733
      %849 = vmatprep.subr.mxu0 0.0
      %850 = vmatpush1.msra.mxu0 %v734
      %851 = vmatprep.subr.mxu0 0.0
      %852 = vmatpush1.msra.mxu0 %v735
      %853 = vmatprep.subr.mxu0 0.0
      %854 = vmatpush1.msra.mxu0 %v736
      %855 = vmatprep.subr.mxu0 0.0
      %856 = vmatpush1.msra.mxu0 %v737
      %857 = vmatprep.subr.mxu0 0.0
      %858 = vmatpush1.msra.mxu0 %v738
      %859 = vmatprep.subr.mxu0 0.0
      %860 = vmatpush1.msra.mxu0 %v739
      %861 = vmatprep.subr.mxu0 0.0
      %862 = vmatpush1.msra.mxu0 %v740
      %863 = vmatprep.subr.mxu0 0.0
      %864 = vmatpush1.msra.mxu0 %v741
      %865 = vmatprep.subr.mxu0 0.0
      %866 = vmatpush1.msra.mxu0 %v742
      %867 = vmatprep.subr.mxu0 0.0
      %868 = vmatpush1.msra.mxu0 0.0
      %869 = vmatprep.subr.mxu0 0.0
      %870 = vmatpush1.msra.mxu0 0.0
      %871 = vmatprep.subr.mxu0 0.0
      %872 = vmatpush1.msra.mxu0 0.0
      %873 = vmatprep.subr.mxu0 0.0
      %874 = vmatpush1.msra.mxu0 0.0
      %875 = vmatprep.subr.mxu0 0.0
      %876 = vmatpush1.msra.mxu0 0.0
      %877 = vmatprep.subr.mxu0 0.0
      %878 = vmatpush1.msra.mxu0 0.0
      %879 = vmatprep.subr.mxu0 0.0
      %880 = vmatpush1.msra.mxu0 0.0
      %881 = vmatprep.subr.mxu0 0.0
      %882 = vmatpush1.msra.mxu0 0.0
      %883 = vmatprep.subr.mxu0 0.0
      %884 = vmatpush1.msra.mxu0 0.0
      %885 = vmatprep.subr.mxu0 0.0
      %886 = vmatpush1.msra.mxu0 0.0
      %887 = vmatprep.subr.mxu0 0.0
      %888 = vmatpush1.msra.mxu0 0.0
      %889 = vmatprep.subr.mxu0 0.0
      %890 = vmatpush1.msra.mxu0 0.0
      %891 = vmatprep.subr.mxu0 0.0
      %892 = vmatpush1.msra.mxu0 0.0
      %893 = vmatprep.subr.mxu0 0.0
      %894 = vmatpush1.msra.mxu0 0.0
      %895 = vmatprep.subr.mxu0 0.0
      %896 = vmatpush1.msra.mxu0 0.0
      %897 = vmatprep.subr.mxu0 0.0
      %898 = vmatpush1.msra.mxu0 0.0
      %899 = vmatprep.mubr.f32.mxu0 0.0
      %900 = vmatmul.mubr.f32.gmra.mrb[0].mxu0 %v719
      %v901 = vpop.f32.mrb[0].mxu0
      %v902 = vadd.f32 %v827, %v901
      %v903 = vpop.f32.mrb[0].mxu0
      %904 = vmatprep.mubr.f32.mxu0 0.0
      %905 = vmatmul.mubr.f32.gmra.mrb[0].mxu0 %v724
      %v906 = vpop.f32.mrb[0].mxu0
      %v907 = vadd.f32 %v832, %v906
      %v908 = vpop.f32.mrb[0].mxu0
      %909 = vdwg.mxu0
      %v911 = vsel %vm645, %v643, 0
      %v914 = vsel %vm645, %v644, 0
      %916 = vmatprep.subr.mxu0 0.0
      %917 = vmatpush1.msra.mxu0 %v632
      %918 = vmatprep.subr.mxu0 0.0
      %919 = vmatpush1.msra.mxu0 %v637
      %920 = vmatprep.subr.mxu0 0.0
      %921 = vmatpush1.msra.mxu0 0.0
      %922 = vmatprep.subr.mxu0 0.0
      %923 = vmatpush1.msra.mxu0 0.0
      %924 = vmatprep.subr.mxu0 0.0
      %925 = vmatpush1.msra.mxu0 0.0
      %926 = vmatprep.subr.mxu0 0.0
      %927 = vmatpush1.msra.mxu0 0.0
      %928 = vmatprep.subr.mxu0 0.0
      %929 = vmatpush1.msra.mxu0 0.0
      %930 = vmatprep.subr.mxu0 0.0
      %931 = vmatpush1.msra.mxu0 0.0
      %932 = vmatprep.subr.mxu0 0.0
      %933 = vmatpush1.msra.mxu0 0.0
      %934 = vmatprep.subr.mxu0 0.0
      %935 = vmatpush1.msra.mxu0 0.0
      %936 = vmatprep.subr.mxu0 0.0
      %937 = vmatpush1.msra.mxu0 0.0
      %938 = vmatprep.subr.mxu0 0.0
      %939 = vmatpush1.msra.mxu0 0.0
      %940 = vmatprep.subr.mxu0 0.0
      %941 = vmatpush1.msra.mxu0 0.0
      %942 = vmatprep.subr.mxu0 0.0
      %943 = vmatpush1.msra.mxu0 0.0
      %944 = vmatprep.subr.mxu0 0.0
      %945 = vmatpush1.msra.mxu0 0.0
      %946 = vmatprep.subr.mxu0 0.0
      %947 = vmatpush1.msra.mxu0 0.0
      %948 = vmatprep.subr.mxu0 0.0
      %949 = vmatpush1.msra.mxu0 0.0
      %950 = vmatprep.subr.mxu0 0.0
      %951 = vmatpush1.msra.mxu0 0.0
      %952 = vmatprep.subr.mxu0 0.0
      %953 = vmatpush1.msra.mxu0 0.0
      %954 = vmatprep.subr.mxu0 0.0
      %955 = vmatpush1.msra.mxu0 0.0
      %956 = vmatprep.subr.mxu0 0.0
      %957 = vmatpush1.msra.mxu0 0.0
      %958 = vmatprep.subr.mxu0 0.0
      %959 = vmatpush1.msra.mxu0 0.0
      %960 = vmatprep.subr.mxu0 0.0
      %961 = vmatpush1.msra.mxu0 0.0
      %962 = vmatprep.subr.mxu0 0.0
      %963 = vmatpush1.msra.mxu0 0.0
      %964 = vmatprep.subr.mxu0 0.0
      %965 = vmatpush1.msra.mxu0 0.0
      %966 = vmatprep.subr.mxu0 0.0
      %967 = vmatpush1.msra.mxu0 0.0
      %968 = vmatprep.subr.mxu0 0.0
      %969 = vmatpush1.msra.mxu0 0.0
      %970 = vmatprep.subr.mxu0 0.0
      %971 = vmatpush1.msra.mxu0 0.0
      %972 = vmatprep.subr.mxu0 0.0
      %973 = vmatpush1.msra.mxu0 0.0
      %974 = vmatprep.subr.mxu0 0.0
      %975 = vmatpush1.msra.mxu0 0.0
      %976 = vmatprep.subr.mxu0 0.0
      %977 = vmatpush1.msra.mxu0 0.0
      %978 = vmatprep.subr.mxu0 0.0
      %979 = vmatpush1.msra.mxu0 0.0
      %980 = vmatprep.mubr.f32.mxu0 0.0
      %981 = vmatmul.mubr.f32.gmra.mrb[0].mxu0 %v911
      %v982 = vpop.f32.mrb[0].mxu0
      %v983 = vadd.f32 0.0, %v982
      %v984 = vpop.f32.mrb[0].mxu0
      %985 = vmatprep.mubr.f32.mxu0 0.0
      %986 = vmatmul.mubr.f32.gmra.mrb[0].mxu0 %v914
      %v987 = vpop.f32.mrb[0].mxu0
      %v988 = vadd.f32 0.0, %v987
      %v989 = vpop.f32.mrb[0].mxu0
      %990 = vdwg.mxu0
      %s991 = scalar_lea.vmem %s6, 256
      %v992 = vld [vmem:[%s991] sm:$0xff]
      %v993 = vld [vmem:[%s991 + $0x8] sm:$0xff]
      %v994 = vld [vmem:[%s991 + $0x10] sm:$0xff]
      %v995 = vld [vmem:[%s991 + $0x18] sm:$0xff]
      %v996 = vld [vmem:[%s991 + $0x20] sm:$0xff]
      %v997 = vld [vmem:[%s991 + $0x28] sm:$0xff]
      %v998 = vld [vmem:[%s991 + $0x30] sm:$0xff]
      %v999 = vld [vmem:[%s991 + $0x38] sm:$0xff]
      %v1000 = vld [vmem:[%s991 + $0x40] sm:$0xff]
      %v1001 = vld [vmem:[%s991 + $0x48] sm:$0xff]
      %v1002 = vld [vmem:[%s991 + $0x50] sm:$0xff]
      %v1003 = vld [vmem:[%s991 + $0x58] sm:$0xff]
      %v1004 = vld [vmem:[%s991 + $0x60] sm:$0xff]
      %v1005 = vld [vmem:[%s991 + $0x68] sm:$0xff]
      %v1006 = vld [vmem:[%s991 + $0x70] sm:$0xff]
      %v1007 = vld [vmem:[%s991 + $0x78] sm:$0xff]
      %1008 = vmatprep.subr.mxu0 0.0
      %1009 = vmatpush1.msra.mxu0 %v992
      %1010 = vmatprep.subr.mxu0 0.0
      %1011 = vmatpush1.msra.mxu0 %v993
      %1012 = vmatprep.subr.mxu0 0.0
      %1013 = vmatpush1.msra.mxu0 %v994
      %1014 = vmatprep.subr.mxu0 0.0
      %1015 = vmatpush1.msra.mxu0 %v995
      %1016 = vmatprep.subr.mxu0 0.0
      %1017 = vmatpush1.msra.mxu0 %v996
      %1018 = vmatprep.subr.mxu0 0.0
      %1019 = vmatpush1.msra.mxu0 %v997
      %1020 = vmatprep.subr.mxu0 0.0
      %1021 = vmatpush1.msra.mxu0 %v998
      %1022 = vmatprep.subr.mxu0 0.0
      %1023 = vmatpush1.msra.mxu0 %v999
      %1024 = vmatprep.subr.mxu0 0.0
      %1025 = vmatpush1.msra.mxu0 %v1000
      %1026 = vmatprep.subr.mxu0 0.0
      %1027 = vmatpush1.msra.mxu0 %v1001
      %1028 = vmatprep.subr.mxu0 0.0
      %1029 = vmatpush1.msra.mxu0 %v1002
      %1030 = vmatprep.subr.mxu0 0.0
      %1031 = vmatpush1.msra.mxu0 %v1003
      %1032 = vmatprep.subr.mxu0 0.0
      %1033 = vmatpush1.msra.mxu0 %v1004
      %1034 = vmatprep.subr.mxu0 0.0
      %1035 = vmatpush1.msra.mxu0 %v1005
      %1036 = vmatprep.subr.mxu0 0.0
      %1037 = vmatpush1.msra.mxu0 %v1006
      %1038 = vmatprep.subr.mxu0 0.0
      %1039 = vmatpush1.msra.mxu0 %v1007
      %1040 = vmatprep.subr.mxu0 0.0
      %1041 = vmatpush1.msra.mxu0 0.0
      %1042 = vmatprep.subr.mxu0 0.0
      %1043 = vmatpush1.msra.mxu0 0.0
      %1044 = vmatprep.subr.mxu0 0.0
      %1045 = vmatpush1.msra.mxu0 0.0
      %1046 = vmatprep.subr.mxu0 0.0
      %1047 = vmatpush1.msra.mxu0 0.0
      %1048 = vmatprep.subr.mxu0 0.0
      %1049 = vmatpush1.msra.mxu0 0.0
      %1050 = vmatprep.subr.mxu0 0.0
      %1051 = vmatpush1.msra.mxu0 0.0
      %1052 = vmatprep.subr.mxu0 0.0
      %1053 = vmatpush1.msra.mxu0 0.0
      %1054 = vmatprep.subr.mxu0 0.0
      %1055 = vmatpush1.msra.mxu0 0.0
      %1056 = vmatprep.subr.mxu0 0.0
      %1057 = vmatpush1.msra.mxu0 0.0
      %1058 = vmatprep.subr.mxu0 0.0
      %1059 = vmatpush1.msra.mxu0 0.0
      %1060 = vmatprep.subr.mxu0 0.0
      %1061 = vmatpush1.msra.mxu0 0.0
      %1062 = vmatprep.subr.mxu0 0.0
      %1063 = vmatpush1.msra.mxu0 0.0
      %1064 = vmatprep.subr.mxu0 0.0
      %1065 = vmatpush1.msra.mxu0 0.0
      %1066 = vmatprep.subr.mxu0 0.0
      %1067 = vmatpush1.msra.mxu0 0.0
      %1068 = vmatprep.subr.mxu0 0.0
      %1069 = vmatpush1.msra.mxu0 0.0
      %1070 = vmatprep.subr.mxu0 0.0
      %1071 = vmatpush1.msra.mxu0 0.0
      %1072 = vmatprep.mubr.f32.mxu0 0.0
      %1073 = vmatmul.mubr.f32.gmra.mrb[0].mxu0 %v983
      %v1074 = vpop.f32.mrb[0].mxu0
      %v1075 = vadd.f32 0.0, %v1074
      %v1076 = vpop.f32.mrb[0].mxu0
      %1077 = vmatprep.mubr.f32.mxu0 0.0
      %1078 = vmatmul.mubr.f32.gmra.mrb[0].mxu0 %v988
      %v1079 = vpop.f32.mrb[0].mxu0
      %v1080 = vadd.f32 0.0, %v1079
      %v1081 = vpop.f32.mrb[0].mxu0
      %1082 = vdwg.mxu0
      %v1083 = vadd.f32 %v902, %v1075
      %v1084 = vadd.f32 %v907, %v1080
      %v1085 = vld [vmem:[%s7] sm:$0x1]
      %v1087 = vlaneseq
      %v1088 = vshrl.u32 %v1087, 7
      %v1089 = vsub.s32 0, %v1088
      %v1090 = vrot.slane %v1085, %v1089
      %v1092 = vadd.f32 %v1083, %v1090
      %v1093 = vadd.f32 %v1084, %v1090
      %v1094 = vmax.f32 %v1092, 0.0
      %v1095 = vmax.f32 %v1093, 0.0
      %1096 = vmatprep.subr.mxu0 0.0
      %1097 = vmatpush1.msra.mxu0 %v1094
      %1098 = vmatprep.subr.mxu0 0.0
      %1099 = vmatpush1.msra.mxu0 %v1095
      %1100 = vmatprep.subr.mxu0 0.0
      %1101 = vmatpush1.msra.mxu0 0.0
      %1102 = vmatprep.subr.mxu0 0.0
      %1103 = vmatpush1.msra.mxu0 0.0
      %1104 = vmatprep.subr.mxu0 0.0
      %1105 = vmatpush1.msra.mxu0 0.0
      %1106 = vmatprep.subr.mxu0 0.0
      %1107 = vmatpush1.msra.mxu0 0.0
      %1108 = vmatprep.subr.mxu0 0.0
      %1109 = vmatpush1.msra.mxu0 0.0
      %1110 = vmatprep.subr.mxu0 0.0
      %1111 = vmatpush1.msra.mxu0 0.0
      %1112 = vmatprep.subr.mxu0 0.0
      %1113 = vmatpush1.msra.mxu0 0.0
      %1114 = vmatprep.subr.mxu0 0.0
      %1115 = vmatpush1.msra.mxu0 0.0
      %1116 = vmatprep.subr.mxu0 0.0
      %1117 = vmatpush1.msra.mxu0 0.0
      %1118 = vmatprep.subr.mxu0 0.0
      %1119 = vmatpush1.msra.mxu0 0.0
      %1120 = vmatprep.subr.mxu0 0.0
      %1121 = vmatpush1.msra.mxu0 0.0
      %1122 = vmatprep.subr.mxu0 0.0
      %1123 = vmatpush1.msra.mxu0 0.0
      %1124 = vmatprep.subr.mxu0 0.0
      %1125 = vmatpush1.msra.mxu0 0.0
      %1126 = vmatprep.subr.mxu0 0.0
      %1127 = vmatpush1.msra.mxu0 0.0
      %1128 = vmatprep.subr.mxu0 0.0
      %1129 = vmatpush1.msra.mxu0 0.0
      %1130 = vmatprep.subr.mxu0 0.0
      %1131 = vmatpush1.msra.mxu0 0.0
      %1132 = vmatprep.subr.mxu0 0.0
      %1133 = vmatpush1.msra.mxu0 0.0
      %1134 = vmatprep.subr.mxu0 0.0
      %1135 = vmatpush1.msra.mxu0 0.0
      %1136 = vmatprep.subr.mxu0 0.0
      %1137 = vmatpush1.msra.mxu0 0.0
      %1138 = vmatprep.subr.mxu0 0.0
      %1139 = vmatpush1.msra.mxu0 0.0
      %1140 = vmatprep.subr.mxu0 0.0
      %1141 = vmatpush1.msra.mxu0 0.0
      %1142 = vmatprep.subr.mxu0 0.0
      %1143 = vmatpush1.msra.mxu0 0.0
      %1144 = vmatprep.subr.mxu0 0.0
      %1145 = vmatpush1.msra.mxu0 0.0
      %1146 = vmatprep.subr.mxu0 0.0
      %1147 = vmatpush1.msra.mxu0 0.0
      %1148 = vmatprep.subr.mxu0 0.0
      %1149 = vmatpush1.msra.mxu0 0.0
      %1150 = vmatprep.subr.mxu0 0.0
      %1151 = vmatpush1.msra.mxu0 0.0
      %1152 = vmatprep.subr.mxu0 0.0
      %1153 = vmatpush1.msra.mxu0 0.0
      %1154 = vmatprep.subr.mxu0 0.0
      %1155 = vmatpush1.msra.mxu0 0.0
      %1156 = vmatprep.subr.mxu0 0.0
      %1157 = vmatpush1.msra.mxu0 0.0
      %1158 = vmatprep.subr.mxu0 0.0
      %1159 = vmatpush1.msra.mxu0 0.0
      %1160 = vmatprep.mubr.f32.mxu0 0.0
      %1161 = vmatmul.mubr.f32.gmra.mrb[0].mxu0 %v647
      %v1162 = vpop.f32.mrb[0].mxu0
      %v1163 = vadd.f32 0.0, %v1162
      %v1164 = vpop.f32.mrb[0].mxu0
      %1165 = vmatprep.mubr.f32.mxu0 0.0
      %1166 = vmatmul.mubr.f32.gmra.mrb[0].mxu0 %v650
      %v1167 = vpop.f32.mrb[0].mxu0
      %v1168 = vadd.f32 0.0, %v1167
      %v1169 = vpop.f32.mrb[0].mxu0
      %1170 = vdwg.mxu0
      %v1171 = vld [vmem:[%s8] sm:$0xff]
      %v1172 = vld [vmem:[%s8 + $0x8] sm:$0xff]
      %v1173 = vld [vmem:[%s8 + $0x10] sm:$0xff]
      %v1174 = vld [vmem:[%s8 + $0x18] sm:$0xff]
      %v1175 = vld [vmem:[%s8 + $0x20] sm:$0xff]
      %v1176 = vld [vmem:[%s8 + $0x28] sm:$0xff]
      %v1177 = vld [vmem:[%s8 + $0x30] sm:$0xff]
      %v1178 = vld [vmem:[%s8 + $0x38] sm:$0xff]
      %s1179 = scalar_lea.vmem %s8, 64
      %v1180 = vld [vmem:[%s1179] sm:$0xff]
      %v1181 = vld [vmem:[%s1179 + $0x8] sm:$0xff]
      %v1182 = vld [vmem:[%s1179 + $0x10] sm:$0xff]
      %v1183 = vld [vmem:[%s1179 + $0x18] sm:$0xff]
      %v1184 = vld [vmem:[%s1179 + $0x20] sm:$0xff]
      %v1185 = vld [vmem:[%s1179 + $0x28] sm:$0xff]
      %v1186 = vld [vmem:[%s1179 + $0x30] sm:$0xff]
      %v1187 = vld [vmem:[%s1179 + $0x38] sm:$0xff]
      %v1189 = vsel %vm476, %v1094, 0
      %v1192 = vsel %vm476, %v1095, 0
      %1194 = vmatprep.subr.mxu0 0.0
      %1195 = vmatpush1.msra.mxu0 %v1180
      %1196 = vmatprep.subr.mxu0 0.0
      %1197 = vmatpush1.msra.mxu0 %v1181
      %1198 = vmatprep.subr.mxu0 0.0
      %1199 = vmatpush1.msra.mxu0 %v1182
      %1200 = vmatprep.subr.mxu0 0.0
      %1201 = vmatpush1.msra.mxu0 %v1183
      %1202 = vmatprep.subr.mxu0 0.0
      %1203 = vmatpush1.msra.mxu0 %v1184
      %1204 = vmatprep.subr.mxu0 0.0
      %1205 = vmatpush1.msra.mxu0 %v1185
      %1206 = vmatprep.subr.mxu0 0.0
      %1207 = vmatpush1.msra.mxu0 %v1186
      %1208 = vmatprep.subr.mxu0 0.0
      %1209 = vmatpush1.msra.mxu0 %v1187
      %1210 = vmatprep.subr.mxu0 0.0
      %1211 = vmatpush1.msra.mxu0 0.0
      %1212 = vmatprep.subr.mxu0 0.0
      %1213 = vmatpush1.msra.mxu0 0.0
      %1214 = vmatprep.subr.mxu0 0.0
      %1215 = vmatpush1.msra.mxu0 0.0
      %1216 = vmatprep.subr.mxu0 0.0
      %1217 = vmatpush1.msra.mxu0 0.0
      %1218 = vmatprep.subr.mxu0 0.0
      %1219 = vmatpush1.msra.mxu0 0.0
      %1220 = vmatprep.subr.mxu0 0.0
      %1221 = vmatpush1.msra.mxu0 0.0
      %1222 = vmatprep.subr.mxu0 0.0
      %1223 = vmatpush1.msra.mxu0 0.0
      %1224 = vmatprep.subr.mxu0 0.0
      %1225 = vmatpush1.msra.mxu0 0.0
      %1226 = vmatprep.subr.mxu0 0.0
      %1227 = vmatpush1.msra.mxu0 0.0
      %1228 = vmatprep.subr.mxu0 0.0
      %1229 = vmatpush1.msra.mxu0 0.0
      %1230 = vmatprep.subr.mxu0 0.0
      %1231 = vmatpush1.msra.mxu0 0.0
      %1232 = vmatprep.subr.mxu0 0.0
      %1233 = vmatpush1.msra.mxu0 0.0
      %1234 = vmatprep.subr.mxu0 0.0
      %1235 = vmatpush1.msra.mxu0 0.0
      %1236 = vmatprep.subr.mxu0 0.0
      %1237 = vmatpush1.msra.mxu0 0.0
      %1238 = vmatprep.subr.mxu0 0.0
      %1239 = vmatpush1.msra.mxu0 0.0
      %1240 = vmatprep.subr.mxu0 0.0
      %1241 = vmatpush1.msra.mxu0 0.0
      %1242 = vmatprep.subr.mxu0 0.0
      %1243 = vmatpush1.msra.mxu0 0.0
      %1244 = vmatprep.subr.mxu0 0.0
      %1245 = vmatpush1.msra.mxu0 0.0
      %1246 = vmatprep.subr.mxu0 0.0
      %1247 = vmatpush1.msra.mxu0 0.0
      %1248 = vmatprep.subr.mxu0 0.0
      %1249 = vmatpush1.msra.mxu0 0.0
      %1250 = vmatprep.subr.mxu0 0.0
      %1251 = vmatpush1.msra.mxu0 0.0
      %1252 = vmatprep.subr.mxu0 0.0
      %1253 = vmatpush1.msra.mxu0 0.0
      %1254 = vmatprep.subr.mxu0 0.0
      %1255 = vmatpush1.msra.mxu0 0.0
      %1256 = vmatprep.subr.mxu0 0.0
      %1257 = vmatpush1.msra.mxu0 0.0
      %1258 = vmatprep.mubr.f32.mxu0 0.0
      %1259 = vmatmul.mubr.f32.gmra.mrb[0].mxu0 %v1189
      %v1260 = vpop.f32.mrb[0].mxu0
      %v1261 = vadd.f32 0.0, %v1260
      %v1262 = vpop.f32.mrb[0].mxu0
      %1263 = vmatprep.mubr.f32.mxu0 0.0
      %1264 = vmatmul.mubr.f32.gmra.mrb[0].mxu0 %v1192
      %v1265 = vpop.f32.mrb[0].mxu0
      %v1266 = vadd.f32 0.0, %v1265
      %v1267 = vpop.f32.mrb[0].mxu0
      %1268 = vdwg.mxu0
      %v1270 = vsel %vm476, %v1163, 0
      %v1273 = vsel %vm476, %v1168, 0
      %1275 = vmatprep.subr.mxu0 0.0
      %1276 = vmatpush1.msra.mxu0 %v1171
      %1277 = vmatprep.subr.mxu0 0.0
      %1278 = vmatpush1.msra.mxu0 %v1172
      %1279 = vmatprep.subr.mxu0 0.0
      %1280 = vmatpush1.msra.mxu0 %v1173
      %1281 = vmatprep.subr.mxu0 0.0
      %1282 = vmatpush1.msra.mxu0 %v1174
      %1283 = vmatprep.subr.mxu0 0.0
      %1284 = vmatpush1.msra.mxu0 %v1175
      %1285 = vmatprep.subr.mxu0 0.0
      %1286 = vmatpush1.msra.mxu0 %v1176
      %1287 = vmatprep.subr.mxu0 0.0
      %1288 = vmatpush1.msra.mxu0 %v1177
      %1289 = vmatprep.subr.mxu0 0.0
      %1290 = vmatpush1.msra.mxu0 %v1178
      %1291 = vmatprep.subr.mxu0 0.0
      %1292 = vmatpush1.msra.mxu0 0.0
      %1293 = vmatprep.subr.mxu0 0.0
      %1294 = vmatpush1.msra.mxu0 0.0
      %1295 = vmatprep.subr.mxu0 0.0
      %1296 = vmatpush1.msra.mxu0 0.0
      %1297 = vmatprep.subr.mxu0 0.0
      %1298 = vmatpush1.msra.mxu0 0.0
      %1299 = vmatprep.subr.mxu0 0.0
      %1300 = vmatpush1.msra.mxu0 0.0
      %1301 = vmatprep.subr.mxu0 0.0
      %1302 = vmatpush1.msra.mxu0 0.0
      %1303 = vmatprep.subr.mxu0 0.0
      %1304 = vmatpush1.msra.mxu0 0.0
      %1305 = vmatprep.subr.mxu0 0.0
      %1306 = vmatpush1.msra.mxu0 0.0
      %1307 = vmatprep.subr.mxu0 0.0
      %1308 = vmatpush1.msra.mxu0 0.0
      %1309 = vmatprep.subr.mxu0 0.0
      %1310 = vmatpush1.msra.mxu0 0.0
      %1311 = vmatprep.subr.mxu0 0.0
      %1312 = vmatpush1.msra.mxu0 0.0
      %1313 = vmatprep.subr.mxu0 0.0
      %1314 = vmatpush1.msra.mxu0 0.0
      %1315 = vmatprep.subr.mxu0 0.0
      %1316 = vmatpush1.msra.mxu0 0.0
      %1317 = vmatprep.subr.mxu0 0.0
      %1318 = vmatpush1.msra.mxu0 0.0
      %1319 = vmatprep.subr.mxu0 0.0
      %1320 = vmatpush1.msra.mxu0 0.0
      %1321 = vmatprep.subr.mxu0 0.0
      %1322 = vmatpush1.msra.mxu0 0.0
      %1323 = vmatprep.subr.mxu0 0.0
      %1324 = vmatpush1.msra.mxu0 0.0
      %1325 = vmatprep.subr.mxu0 0.0
      %1326 = vmatpush1.msra.mxu0 0.0
      %1327 = vmatprep.subr.mxu0 0.0
      %1328 = vmatpush1.msra.mxu0 0.0
      %1329 = vmatprep.subr.mxu0 0.0
      %1330 = vmatpush1.msra.mxu0 0.0
      %1331 = vmatprep.subr.mxu0 0.0
      %1332 = vmatpush1.msra.mxu0 0.0
      %1333 = vmatprep.subr.mxu0 0.0
      %1334 = vmatpush1.msra.mxu0 0.0
      %1335 = vmatprep.subr.mxu0 0.0
      %1336 = vmatpush1.msra.mxu0 0.0
      %1337 = vmatprep.subr.mxu0 0.0
      %1338 = vmatpush1.msra.mxu0 0.0
      %1339 = vmatprep.mubr.f32.mxu0 0.0
      %1340 = vmatmul.mubr.f32.gmra.mrb[0].mxu0 %v1270
      %v1341 = vpop.f32.mrb[0].mxu0
      %v1342 = vadd.f32 %v1261, %v1341
      %v1343 = vpop.f32.mrb[0].mxu0
      %1344 = vmatprep.mubr.f32.mxu0 0.0
      %1345 = vmatmul.mubr.f32.gmra.mrb[0].mxu0 %v1273
      %v1346 = vpop.f32.mrb[0].mxu0
      %v1347 = vadd.f32 %v1266, %v1346
      %v1348 = vpop.f32.mrb[0].mxu0
      %1349 = vdwg.mxu0
      %1350 = vmatprep.subr.mxu0 0.0
      %1351 = vmatpush1.msra.mxu0 %v1094
      %1352 = vmatprep.subr.mxu0 0.0
      %1353 = vmatpush1.msra.mxu0 %v1095
      %1354 = vmatprep.subr.mxu0 0.0
      %1355 = vmatpush1.msra.mxu0 0.0
      %1356 = vmatprep.subr.mxu0 0.0
      %1357 = vmatpush1.msra.mxu0 0.0
      %1358 = vmatprep.subr.mxu0 0.0
      %1359 = vmatpush1.msra.mxu0 0.0
      %1360 = vmatprep.subr.mxu0 0.0
      %1361 = vmatpush1.msra.mxu0 0.0
      %1362 = vmatprep.subr.mxu0 0.0
      %1363 = vmatpush1.msra.mxu0 0.0
      %1364 = vmatprep.subr.mxu0 0.0
      %1365 = vmatpush1.msra.mxu0 0.0
      %1366 = vmatprep.subr.mxu0 0.0
      %1367 = vmatpush1.msra.mxu0 0.0
      %1368 = vmatprep.subr.mxu0 0.0
      %1369 = vmatpush1.msra.mxu0 0.0
      %1370 = vmatprep.subr.mxu0 0.0
      %1371 = vmatpush1.msra.mxu0 0.0
      %1372 = vmatprep.subr.mxu0 0.0
      %1373 = vmatpush1.msra.mxu0 0.0
      %1374 = vmatprep.subr.mxu0 0.0
      %1375 = vmatpush1.msra.mxu0 0.0
      %1376 = vmatprep.subr.mxu0 0.0
      %1377 = vmatpush1.msra.mxu0 0.0
      %1378 = vmatprep.subr.mxu0 0.0
      %1379 = vmatpush1.msra.mxu0 0.0
      %1380 = vmatprep.subr.mxu0 0.0
      %1381 = vmatpush1.msra.mxu0 0.0
      %1382 = vmatprep.subr.mxu0 0.0
      %1383 = vmatpush1.msra.mxu0 0.0
      %1384 = vmatprep.subr.mxu0 0.0
      %1385 = vmatpush1.msra.mxu0 0.0
      %1386 = vmatprep.subr.mxu0 0.0
      %1387 = vmatpush1.msra.mxu0 0.0
      %1388 = vmatprep.subr.mxu0 0.0
      %1389 = vmatpush1.msra.mxu0 0.0
      %1390 = vmatprep.subr.mxu0 0.0
      %1391 = vmatpush1.msra.mxu0 0.0
      %1392 = vmatprep.subr.mxu0 0.0
      %1393 = vmatpush1.msra.mxu0 0.0
      %1394 = vmatprep.subr.mxu0 0.0
      %1395 = vmatpush1.msra.mxu0 0.0
      %1396 = vmatprep.subr.mxu0 0.0
      %1397 = vmatpush1.msra.mxu0 0.0
      %1398 = vmatprep.subr.mxu0 0.0
      %1399 = vmatpush1.msra.mxu0 0.0
      %1400 = vmatprep.subr.mxu0 0.0
      %1401 = vmatpush1.msra.mxu0 0.0
      %1402 = vmatprep.subr.mxu0 0.0
      %1403 = vmatpush1.msra.mxu0 0.0
      %1404 = vmatprep.subr.mxu0 0.0
      %1405 = vmatpush1.msra.mxu0 0.0
      %1406 = vmatprep.subr.mxu0 0.0
      %1407 = vmatpush1.msra.mxu0 0.0
      %1408 = vmatprep.subr.mxu0 0.0
      %1409 = vmatpush1.msra.mxu0 0.0
      %1410 = vmatprep.subr.mxu0 0.0
      %1411 = vmatpush1.msra.mxu0 0.0
      %1412 = vmatprep.subr.mxu0 0.0
      %1413 = vmatpush1.msra.mxu0 0.0
      %1414 = vmatprep.mubr.f32.mxu0 0.0
      %1415 = vmatmul.mubr.f32.gmra.mrb[0].mxu0 %v911
      %v1416 = vpop.f32.mrb[0].mxu0
      %v1417 = vadd.f32 0.0, %v1416
      %v1418 = vpop.f32.mrb[0].mxu0
      %1419 = vmatprep.mubr.f32.mxu0 0.0
      %1420 = vmatmul.mubr.f32.gmra.mrb[0].mxu0 %v914
      %v1421 = vpop.f32.mrb[0].mxu0
      %v1422 = vadd.f32 0.0, %v1421
      %v1423 = vpop.f32.mrb[0].mxu0
      %1424 = vdwg.mxu0
      %s1425 = scalar_lea.vmem %s8, 128
      %v1426 = vld [vmem:[%s1425] sm:$0xff]
      %v1427 = vld [vmem:[%s1425 + $0x8] sm:$0xff]
      %v1428 = vld [vmem:[%s1425 + $0x10] sm:$0xff]
      %v1429 = vld [vmem:[%s1425 + $0x18] sm:$0xff]
      %v1430 = vld [vmem:[%s1425 + $0x20] sm:$0xff]
      %v1431 = vld [vmem:[%s1425 + $0x28] sm:$0xff]
      %v1432 = vld [vmem:[%s1425 + $0x30] sm:$0xff]
      %v1433 = vld [vmem:[%s1425 + $0x38] sm:$0xff]
      %v1435 = vsel %vm476, %v1417, 0
      %v1438 = vsel %vm476, %v1422, 0
      %1440 = vmatprep.subr.mxu0 0.0
      %1441 = vmatpush1.msra.mxu0 %v1426
      %1442 = vmatprep.subr.mxu0 0.0
      %1443 = vmatpush1.msra.mxu0 %v1427
      %1444 = vmatprep.subr.mxu0 0.0
      %1445 = vmatpush1.msra.mxu0 %v1428
      %1446 = vmatprep.subr.mxu0 0.0
      %1447 = vmatpush1.msra.mxu0 %v1429
      %1448 = vmatprep.subr.mxu0 0.0
      %1449 = vmatpush1.msra.mxu0 %v1430
      %1450 = vmatprep.subr.mxu0 0.0
      %1451 = vmatpush1.msra.mxu0 %v1431
      %1452 = vmatprep.subr.mxu0 0.0
      %1453 = vmatpush1.msra.mxu0 %v1432
      %1454 = vmatprep.subr.mxu0 0.0
      %1455 = vmatpush1.msra.mxu0 %v1433
      %1456 = vmatprep.subr.mxu0 0.0
      %1457 = vmatpush1.msra.mxu0 0.0
      %1458 = vmatprep.subr.mxu0 0.0
      %1459 = vmatpush1.msra.mxu0 0.0
      %1460 = vmatprep.subr.mxu0 0.0
      %1461 = vmatpush1.msra.mxu0 0.0
      %1462 = vmatprep.subr.mxu0 0.0
      %1463 = vmatpush1.msra.mxu0 0.0
      %1464 = vmatprep.subr.mxu0 0.0
      %1465 = vmatpush1.msra.mxu0 0.0
      %1466 = vmatprep.subr.mxu0 0.0
      %1467 = vmatpush1.msra.mxu0 0.0
      %1468 = vmatprep.subr.mxu0 0.0
      %1469 = vmatpush1.msra.mxu0 0.0
      %1470 = vmatprep.subr.mxu0 0.0
      %1471 = vmatpush1.msra.mxu0 0.0
      %1472 = vmatprep.subr.mxu0 0.0
      %1473 = vmatpush1.msra.mxu0 0.0
      %1474 = vmatprep.subr.mxu0 0.0
      %1475 = vmatpush1.msra.mxu0 0.0
      %1476 = vmatprep.subr.mxu0 0.0
      %1477 = vmatpush1.msra.mxu0 0.0
      %1478 = vmatprep.subr.mxu0 0.0
      %1479 = vmatpush1.msra.mxu0 0.0
      %1480 = vmatprep.subr.mxu0 0.0
      %1481 = vmatpush1.msra.mxu0 0.0
      %1482 = vmatprep.subr.mxu0 0.0
      %1483 = vmatpush1.msra.mxu0 0.0
      %1484 = vmatprep.subr.mxu0 0.0
      %1485 = vmatpush1.msra.mxu0 0.0
      %1486 = vmatprep.subr.mxu0 0.0
      %1487 = vmatpush1.msra.mxu0 0.0
      %1488 = vmatprep.subr.mxu0 0.0
      %1489 = vmatpush1.msra.mxu0 0.0
      %1490 = vmatprep.subr.mxu0 0.0
      %1491 = vmatpush1.msra.mxu0 0.0
      %1492 = vmatprep.subr.mxu0 0.0
      %1493 = vmatpush1.msra.mxu0 0.0
      %1494 = vmatprep.subr.mxu0 0.0
      %1495 = vmatpush1.msra.mxu0 0.0
      %1496 = vmatprep.subr.mxu0 0.0
      %1497 = vmatpush1.msra.mxu0 0.0
      %1498 = vmatprep.subr.mxu0 0.0
      %1499 = vmatpush1.msra.mxu0 0.0
      %1500 = vmatprep.subr.mxu0 0.0
      %1501 = vmatpush1.msra.mxu0 0.0
      %1502 = vmatprep.subr.mxu0 0.0
      %1503 = vmatpush1.msra.mxu0 0.0
      %1504 = vmatprep.mubr.f32.mxu0 0.0
      %1505 = vmatmul.mubr.f32.gmra.mrb[0].mxu0 %v1435
      %v1506 = vpop.f32.mrb[0].mxu0
      %v1507 = vadd.f32 0.0, %v1506
      %v1508 = vpop.f32.mrb[0].mxu0
      %1509 = vmatprep.mubr.f32.mxu0 0.0
      %1510 = vmatmul.mubr.f32.gmra.mrb[0].mxu0 %v1438
      %v1511 = vpop.f32.mrb[0].mxu0
      %v1512 = vadd.f32 0.0, %v1511
      %v1513 = vpop.f32.mrb[0].mxu0
      %1514 = vdwg.mxu0
      %v1515 = vadd.f32 %v1342, %v1507
      %v1516 = vadd.f32 %v1347, %v1512
      %v1517 = vld [vmem:[%s9] sm:$0x1]
      %v1519 = vlaneseq
      %v1520 = vshrl.u32 %v1519, 7
      %v1521 = vsub.s32 0, %v1520
      %v1522 = vrot.slane %v1517, %v1521
      %v1524 = vadd.f32 %v1515, %v1522
      %v1525 = vadd.f32 %v1516, %v1522
      %v1526 = vmax.f32 %v1524, 0.0
      %v1527 = vmax.f32 %v1525, 0.0
      %1528 = vst.msk [vmem:[%s376] sm:$0xff] %vm476, %v1526
      %1529 = vst.msk [vmem:[%s376 + $0x8] sm:$0xff] %vm476, %v1527
      %p1530 = scmp.lt.s32.totalorder %s21, 1
      %s1531 = scalar_select %p1530, %s21, 1
      %s1532 = smul.addr %s1531, 2
      %s1533 = smul.addr %s1532, 8
      %s1534 = scalar_lea.vmem %s10, %s1533
      // Predicated region
      $region61: #{up_forward.1} parent=59 // pred_check
        %p1535 = pneg %p259
      $region62: #{up_forward.1} parent=59 // pred_check_branch
        %1537 = sbr.rel (%p1535) target = $region64
      $region63: #{up_forward.1} parent=59 // pred_region
        _
      $region64: #{up_forward.1} parent=59 // pred_fallthru
        _
    $region60: #{up_forward.1} parent=5 // pred_fallthru
      _
    %p1538 = scmp.le.s32.totalorder 2, %s16
    // Predicated region
    $region65: #{up_forward.1} parent=5 // pred_check
      %p1539 = pneg %p1538
    $region66: #{up_forward.1} parent=5 // pred_check_branch
      %1541 = sbr.rel (%p1539) target = $region68
    $region67: #{up_forward.1} parent=5 // pred_region
      %s1542 = ssub.s32 %s16, 2
      // Predicated region
      $region69: #{up_forward.1} parent=67 // pred_check
        %p1543 = pneg %p265
      $region70: #{up_forward.1} parent=67 // pred_check_branch
        %1545 = sbr.rel (%p1543) target = $region72
      $region71: #{up_forward.1} parent=67 // pred_region
        %p1546 = scmp.lt.s32.totalorder %s22, 1
        %s1547 = scalar_select %p1546, %s22, 1
        %s1548 = smul.addr %s1547, 2
        %s1549 = smul.addr %s1548, 8
        %s1550 = scalar_lea.vmem %s10, %s1549
      $region72: #{up_forward.1} parent=67 // pred_fallthru
        _
    $region68: #{up_forward.1} parent=5 // pred_fallthru
      _
  $region6: #{up_forward.1} parent=0 // loop_footer
    %s20 = sadd.s32 1, %s16
  $region7: #{up_forward.1} parent=0 // loop_footer_branch
    %15 = sbr.rel target = $region3
  $region8: #{up_forward.1} parent=0 // loop_exit
    _

</llo_original>
